<compile_context>
chip_gen: v7x
topology: tpu7x:2x2x1
jax: 0.10.0
libtpu: 0.0.40
codegen_flags: <defaults>
</compile_context>

<pallas_src>
import jax
import jax.numpy as jnp
import numpy as np
from jax.experimental import pallas as pl
from jax.experimental.pallas import tpu as pltpu


def _round_up(x, m):
    return (x + m - 1) // m * m


# ---------------------------------------------------------------------------
# XLA-side prep: phase-stack the raw input for conv1(k=2,pad=1)+pool1(4,4) and fold
# the batch into the lane axis.  (Hard-codes k=2 / stride=1 / pad=1 / MaxPool(4,4),
# floor mode, matching the module.)
# ---------------------------------------------------------------------------
def _prep_conv_input(x, bblk, seg):
    """x: (B, 2, L) f32 -> s1: (nblk, 16, bblk*seg) with
      s1[g, m*4 + t*2 + c, b*seg + i] = xpad[g*bblk + b, c, 4*i + m + t]   (i < P1, else 0)
    where m = pool1 phase, t = conv1 tap, xpad = zero-pad(1, 1)."""
    B, C, L = x.shape
    P1 = (L + 1) // 4
    bpad = _round_up(B, bblk)
    xpad = jnp.pad(x, ((0, bpad - B), (0, 0), (1, 1)))          # (bpad, C, L + 2)
    taps = []
    for t in range(2):
        w = xpad[:, :, t:t + 4 * P1].reshape(bpad, C, P1, 4)    # [b, c, i, m]
        taps.append(w)
    s = jnp.concatenate(taps, axis=1)                           # (bpad, 2C, P1, 4), ch idx t*2+c
    s = jnp.transpose(s, (0, 3, 1, 2))                          # (bpad, 4(m), 4(tc), P1)
    s = s.reshape(bpad, 16, P1)                                 # sublane idx = m*4 + tc
    s = jnp.pad(s, ((0, 0), (0, 0), (0, seg - P1)))             # pad positions to segment width
    nblk = bpad // bblk
    s = s.reshape(nblk, bblk, 16, seg).transpose(0, 2, 1, 3)    # (nblk, 16, bblk, seg)
    return s.reshape(nblk, 16, bblk * seg)                      # lane = b_in_block*seg + i


# ---------------------------------------------------------------------------
# Kernel 1: conv1 + ReLU + maxpool1 + conv2 + ReLU (full length), batch-in-lanes
# ---------------------------------------------------------------------------
def _conv_stack_kernel(s_ref, mask_ref, w1_ref, b1_ref, w2a_ref, w2b_ref, b2_ref, o_ref):
    # s_ref: (1, 16, NB) phase-stacked conv1 taps, NB = bblk * seg
    # mask_ref: (1, NB) 1.0 for valid pool1 positions (i < P1) within each lane segment
    # w1_ref: (8, 4) conv1 taps concatenated; b1_ref: (8, 1)
    # w2a_ref / w2b_ref: (16, 8) conv2 tap0 / tap1; b2_ref: (16, 1)
    # o_ref: (1, 16, NB) ReLU(conv2) at full length (pool2 + flatten done in XLA glue)
    w1 = w1_ref[...]
    # conv1 + pool1: max over the 4 pooling phases; bias add / ReLU hoisted out of the loop.
    acc = jnp.dot(w1, s_ref[0, 0:4, :], preferred_element_type=jnp.float32)
    for m in range(1, 4):
        acc = jnp.maximum(
            acc, jnp.dot(w1, s_ref[0, 4 * m:4 * m + 4, :],
                         preferred_element_type=jnp.float32))
    p1 = jnp.maximum(acc + b1_ref[...], 0.0) * mask_ref[...]      # (8, NB)
    # conv2 tap0 needs p1 shifted right by one position per batch segment; a single
    # global lane roll is correct because column seg-1 of every segment is masked to 0
    # (seg >= P1 + 1), so nothing leaks across segment (or wrap-around) boundaries.
    p1_shift = pltpu.roll(p1, shift=1, axis=1)
    h2 = (jnp.dot(w2a_ref[...], p1_shift, preferred_element_type=jnp.float32)
          + jnp.dot(w2b_ref[...], p1, preferred_element_type=jnp.float32)
          + b2_ref[...])
    o_ref[0] = jnp.maximum(h2, 0.0).astype(o_ref.dtype)


def _conv_stack(s1, mask, w1c, b1, w2t0, w2t1, b2):
    nblk, kc1, NB = s1.shape
    c1 = w1c.shape[0]
    c2 = w2t0.shape[0]
    flops = nblk * NB * (2 * c1 * w1c.shape[1] * 4 + 2 * c2 * c1 * 2)
    bytes_acc = 4 * (s1.size + mask.size + nblk * c2 * NB
                     + w1c.size + b1.size + w2t0.size + w2t1.size + b2.size)
    return pl.pallas_call(
        _conv_stack_kernel,
        out_shape=jax.ShapeDtypeStruct((nblk, c2, NB), jnp.float32),
        grid=(nblk,),
        in_specs=[
            pl.BlockSpec((1, kc1, NB), lambda i: (i, 0, 0)),
            pl.BlockSpec((1, NB), lambda i: (0, 0)),
            pl.BlockSpec((c1, w1c.shape[1]), lambda i: (0, 0)),
            pl.BlockSpec((c1, 1), lambda i: (0, 0)),
            pl.BlockSpec((c2, c1), lambda i: (0, 0)),
            pl.BlockSpec((c2, c1), lambda i: (0, 0)),
            pl.BlockSpec((c2, 1), lambda i: (0, 0)),
        ],
        out_specs=pl.BlockSpec((1, c2, NB), lambda i: (i, 0, 0)),
        compiler_params=pltpu.CompilerParams(dimension_semantics=("parallel",)),
        cost_estimate=pl.CostEstimate(flops=int(flops), transcendentals=0,
                                      bytes_accessed=int(bytes_acc)),
    )(s1, mask, w1c, b1, w2t0, w2t1, b2)


# ---------------------------------------------------------------------------
# Kernel 2: fc1 + ReLU + (dropout = identity at inference) + fc2, batch-blocked M
# ---------------------------------------------------------------------------
def _fc_head_kernel(a_ref, w1_ref, b1_ref, w2_ref, b2_ref, o_ref):
    # a_ref: (Mblk, d_flat) f32; w1_ref: (d_flat, H) bf16 (resident); b1_ref: (1, H)
    # w2_ref: (H, NC); b2_ref: (1, NC); o_ref: (Mblk, NC)
    a = a_ref[...].astype(w1_ref.dtype)                           # bf16 MXU inputs, f32 accumulate
    h = jnp.dot(a, w1_ref[...], preferred_element_type=jnp.float32) + b1_ref[...]
    h = jnp.maximum(h, 0.0)
    # TODO(synk): nn.Dropout(0.8) is identity at inference; training-mode dropout
    # (pltpu.prng_seed / prng_random_bits masking) is not implemented here.
    o_ref[...] = (jnp.dot(h, w2_ref[...], preferred_element_type=jnp.float32)
                  + b2_ref[...]).astype(o_ref.dtype)


def _fc_head(act, fc1_wt, fc1_b, fc2_wt, fc2_b, mblk):
    B, d_flat = act.shape
    H = fc1_wt.shape[1]
    NC = fc2_wt.shape[1]
    bpad = _round_up(B, mblk)
    act_p = jnp.pad(act, ((0, bpad - B), (0, 0)))
    nblk = bpad // mblk
    flops = bpad * (2 * d_flat * H + 2 * H * NC)
    bytes_acc = (act_p.size * 4 + fc1_wt.size * 2 + fc1_b.size * 4
                 + fc2_wt.size * 4 + fc2_b.size * 4 + bpad * NC * 4)
    out = pl.pallas_call(
        _fc_head_kernel,
        out_shape=jax.ShapeDtypeStruct((bpad, NC), jnp.float32),
        grid=(nblk,),
        in_specs=[
            pl.BlockSpec((mblk, d_flat), lambda i: (i, 0)),
            # fc1 weight is grid-invariant (index map (0,0)); at these block sizes even the
            # default double-buffered 2 x ~3.8 MB bf16 copy fits v7x's scoped VMEM limit.
            pl.BlockSpec((d_flat, H), lambda i: (0, 0)),
            pl.BlockSpec((1, H), lambda i: (0, 0)),
            pl.BlockSpec((H, NC), lambda i: (0, 0)),
            pl.BlockSpec((1, NC), lambda i: (0, 0)),
        ],
        out_specs=pl.BlockSpec((mblk, NC), lambda i: (i, 0)),
        compiler_params=pltpu.CompilerParams(dimension_semantics=("parallel",)),
        cost_estimate=pl.CostEstimate(flops=int(flops), transcendentals=0,
                                      bytes_accessed=int(bytes_acc)),
    )(act_p, fc1_wt, fc1_b, fc2_wt, fc2_b)
    return out[:B]


# ---------------------------------------------------------------------------
# Full forward pass (inference)
# ---------------------------------------------------------------------------
def cnn1d_forward(prep, x, *, conv_batch_block=8, fc_batch_block=8):
    """prep: prepared params (see prepare_params). x: (B, 2, L) f32. Returns (B, NC)."""
    B, _, L = x.shape
    P1 = (L + 1) // 4                       # pool1 output length
    L2 = P1 + 1                             # conv2 output length
    P2 = L2 // 4                            # pool2 output length (floor)
    assert P2 >= 1, "sequence too short for the two conv/pool stages"
    # Per-element lane segment: >= P1 + 1 so the roll wrap lands on a masked column;
    # rounded to a multiple of 128 for dense, aligned vreg tiling.
    seg = _round_up(P1 + 1, 128)
    bblk = conv_batch_block

    s1 = _prep_conv_input(x, bblk, seg)                              # tiny XLA prep
    seg_mask = (jnp.arange(seg) < P1).astype(jnp.float32)
    mask = jnp.tile(seg_mask, (bblk,))[None, :]                      # (1, bblk*seg)

    h2 = _conv_stack(s1, mask, prep["conv1_wc"], prep["conv1_b"],
                     prep["conv2_w0"], prep["conv2_w1"], prep["conv2_b"])

    # Unfold batch from lanes, pool2 (floor) + torch channel-major flatten: tiny XLA glue.
    nblk, c2, _ = h2.shape
    h2 = h2.reshape(nblk, c2, bblk, seg).transpose(0, 2, 1, 3).reshape(nblk * bblk, c2, seg)
    p2 = jnp.max(h2[:B, :, :4 * P2].reshape(B, c2, P2, 4), axis=-1)  # (B, 16, P2)
    act = p2.reshape(B, c2 * P2)                                     # (B, d_flat)

    return _fc_head(act, prep["fc1_wt"], prep["fc1_b"],
                    prep["fc2_wt"], prep["fc2_b"], fc_batch_block)


# ---------------------------------------------------------------------------
# Parameters: torch-layout init + one-time layout/dtype prep (NOT per forward call)
# ---------------------------------------------------------------------------
def init_params(key, L, num_classes=2):
    """PyTorch-layout synthetic weights, uniform(+-1/sqrt(fan_in))."""
    ks = jax.random.split(key, 8)

    def u(k, shape, fan_in):
        bound = 1.0 / (fan_in ** 0.5)
        return jax.random.uniform(k, shape, jnp.float32, -bound, bound)

    l1 = (L + 2 - 2) // 1 + 1
    p1 = l1 // 4
    l2 = (p1 + 2 - 2) // 1 + 1
    p2 = l2 // 4
    d_flat = 16 * p2
    return {
        "conv1_w": u(ks[0], (8, 2, 2), 2 * 2),
        "conv1_b": u(ks[1], (8,), 2 * 2),
        "conv2_w": u(ks[2], (16, 8, 2), 8 * 2),
        "conv2_b": u(ks[3], (16,), 8 * 2),
        "fc1_w": u(ks[4], (256, d_flat), d_flat),
        "fc1_b": u(ks[5], (256,), d_flat),
        "fc2_w": u(ks[6], (num_classes, 256), 256),
        "fc2_b": u(ks[7], (num_classes,), 256),
    }


def prepare_params(p):
    """One-time conversion from torch layout to kernel layout (outside the hot path)."""
    return {
        # conv1 taps concatenated on the input-channel axis: column index = tap*2 + c
        "conv1_wc": jnp.concatenate([p["conv1_w"][:, :, 0], p["conv1_w"][:, :, 1]], axis=1),
        "conv1_b": p["conv1_b"].reshape(-1, 1),
        "conv2_w0": p["conv2_w"][:, :, 0],                 # (16, 8) tap 0
        "conv2_w1": p["conv2_w"][:, :, 1],                 # (16, 8) tap 1
        "conv2_b": p["conv2_b"].reshape(-1, 1),
        # fc1 weight pre-transposed to (d_flat, 256) bf16: halves the dominant weight DMA,
        # matches torch's channel-major flatten; accumulation stays f32 in-kernel.
        "fc1_wt": p["fc1_w"].T.astype(jnp.bfloat16),
        "fc1_b": p["fc1_b"].reshape(1, -1),
        "fc2_wt": p["fc2_w"].T,                            # (256, NC) f32 (tiny)
        "fc2_b": p["fc2_b"].reshape(1, -1),
    }


# ---------------------------------------------------------------------------
# Pure-JAX reference (torch semantics) for a correctness check
# ---------------------------------------------------------------------------
def reference_forward(params, x):
    def conv1d_k2_pad1(u, w, b):
        up = jnp.pad(u, ((0, 0), (0, 0), (1, 1)))
        return (jnp.einsum("oc,bcl->bol", w[:, :, 0], up[:, :, :-1])
                + jnp.einsum("oc,bcl->bol", w[:, :, 1], up[:, :, 1:])
                + b[None, :, None])

    def maxpool4(u):
        B, C, Lp = u.shape
        P = Lp // 4
        return jnp.max(u[:, :, :4 * P].reshape(B, C, P, 4), axis=-1)

    h = jax.nn.relu(conv1d_k2_pad1(x, params["conv1_w"], params["conv1_b"]))
    h = maxpool4(h)
    h = jax.nn.relu(conv1d_k2_pad1(h, params["conv2_w"], params["conv2_b"]))
    h = maxpool4(h)
    h = h.reshape(h.shape[0], -1)
    h = jax.nn.relu(h @ params["fc1_w"].T + params["fc1_b"])
    return h @ params["fc2_w"].T + params["fc2_b"]


if __name__ == "__main__":
    key = jax.random.PRNGKey(0)
    kx, kp = jax.random.split(key)

    # Small shapes consistent with the module (original uses L=7500): B=2, C_in=2, L=128.
    B, C_in, L = 2, 2, 128
    num_classes = 2

    x = jax.random.normal(kx, (B, C_in, L), jnp.float32)
    params = init_params(kp, L=L, num_classes=num_classes)
    prep = prepare_params(params)            # one-time layout/dtype prep

    fwd = jax.jit(cnn1d_forward)
    out = fwd(prep, x)
    jax.block_until_ready(out)
    assert out.shape == (B, num_classes)

    ref = reference_forward(params, x)
    # tolerance covers the intentional bf16 quantization of the fc1 weight/activation
    np.testing.assert_allclose(np.asarray(out), np.asarray(ref), rtol=2e-2, atol=2e-2)

    print("KERNEL_OK")
</pallas_src>

<mosaic_0001>
module attributes {stable_mosaic.version = 11 : i64} {
  func.func @_conv_stack_kernel(%arg0: i32, %arg1: memref<1x16x1024xf32, #tpu.memory_space<vmem>>, %arg2: memref<1x1024xf32, #tpu.memory_space<vmem>>, %arg3: memref<8x4xf32, #tpu.memory_space<vmem>>, %arg4: memref<8x1xf32, #tpu.memory_space<vmem>>, %arg5: memref<16x8xf32, #tpu.memory_space<vmem>>, %arg6: memref<16x8xf32, #tpu.memory_space<vmem>>, %arg7: memref<16x1xf32, #tpu.memory_space<vmem>>, %arg8: memref<1x16x1024xf32, #tpu.memory_space<vmem>>) attributes {dimension_semantics = [#tpu.dimension_semantics<parallel>], iteration_bounds = array<i64: 1>, scalar_prefetch = 0 : i64, scratch_operands = 0 : i64, tpu.core_type = #tpu.core_type<tc>, window_params = [{transform_indices = @transform_0, window_bounds = array<i64: 1, 16, 1024>}, {pipeline_mode = #tpu.pipeline_mode<synchronous>, transform_indices = @transform_1, window_bounds = array<i64: 1, 1024>}, {pipeline_mode = #tpu.pipeline_mode<synchronous>, transform_indices = @transform_2, window_bounds = array<i64: 8, 4>}, {pipeline_mode = #tpu.pipeline_mode<synchronous>, transform_indices = @transform_3, window_bounds = array<i64: 8, 1>}, {pipeline_mode = #tpu.pipeline_mode<synchronous>, transform_indices = @transform_4, window_bounds = array<i64: 16, 8>}, {pipeline_mode = #tpu.pipeline_mode<synchronous>, transform_indices = @transform_5, window_bounds = array<i64: 16, 8>}, {pipeline_mode = #tpu.pipeline_mode<synchronous>, transform_indices = @transform_6, window_bounds = array<i64: 16, 1>}, {transform_indices = @transform_7, window_bounds = array<i64: 1, 16, 1024>}]} {
    %c0 = arith.constant 0 : index
    %c0_0 = arith.constant 0 : index
    %0 = vector.load %arg3[%c0, %c0_0] : memref<8x4xf32, #tpu.memory_space<vmem>>, vector<8x4xf32>
    %c0_1 = arith.constant 0 : index
    %c0_2 = arith.constant 0 : index
    %c0_3 = arith.constant 0 : index
    %1 = vector.load %arg1[%c0_1, %c0_2, %c0_3] : memref<1x16x1024xf32, #tpu.memory_space<vmem>>, vector<1x4x1024xf32>
    %2 = vector.shape_cast %1 : vector<1x4x1024xf32> to vector<4x1024xf32>
    %cst = arith.constant dense<0.000000e+00> : vector<8x1024xf32>
    %3 = tpu.matmul %0, %2, %cst {dimension_numbers = #tpu.dot_dimension_numbers<[1], [0], [0], [1], [0, 0, 1, 1], [], []>} : vector<8x4xf32>, vector<4x1024xf32>, vector<8x1024xf32> -> vector<8x1024xf32>
    %c0_4 = arith.constant 0 : index
    %c4 = arith.constant 4 : index
    %c0_5 = arith.constant 0 : index
    %4 = vector.load %arg1[%c0_4, %c4, %c0_5] : memref<1x16x1024xf32, #tpu.memory_space<vmem>>, vector<1x4x1024xf32>
    %5 = vector.shape_cast %4 : vector<1x4x1024xf32> to vector<4x1024xf32>
    %cst_6 = arith.constant dense<0.000000e+00> : vector<8x1024xf32>
    %6 = tpu.matmul %0, %5, %cst_6 {dimension_numbers = #tpu.dot_dimension_numbers<[1], [0], [0], [1], [0, 0, 1, 1], [], []>} : vector<8x4xf32>, vector<4x1024xf32>, vector<8x1024xf32> -> vector<8x1024xf32>
    %7 = arith.maximumf %3, %6 : vector<8x1024xf32>
    %c0_7 = arith.constant 0 : index
    %c8 = arith.constant 8 : index
    %c0_8 = arith.constant 0 : index
    %8 = vector.load %arg1[%c0_7, %c8, %c0_8] : memref<1x16x1024xf32, #tpu.memory_space<vmem>>, vector<1x4x1024xf32>
    %9 = vector.shape_cast %8 : vector<1x4x1024xf32> to vector<4x1024xf32>
    %cst_9 = arith.constant dense<0.000000e+00> : vector<8x1024xf32>
    %10 = tpu.matmul %0, %9, %cst_9 {dimension_numbers = #tpu.dot_dimension_numbers<[1], [0], [0], [1], [0, 0, 1, 1], [], []>} : vector<8x4xf32>, vector<4x1024xf32>, vector<8x1024xf32> -> vector<8x1024xf32>
    %11 = arith.maximumf %7, %10 : vector<8x1024xf32>
    %c0_10 = arith.constant 0 : index
    %c12 = arith.constant 12 : index
    %c0_11 = arith.constant 0 : index
    %12 = vector.load %arg1[%c0_10, %c12, %c0_11] : memref<1x16x1024xf32, #tpu.memory_space<vmem>>, vector<1x4x1024xf32>
    %13 = vector.shape_cast %12 : vector<1x4x1024xf32> to vector<4x1024xf32>
    %cst_12 = arith.constant dense<0.000000e+00> : vector<8x1024xf32>
    %14 = tpu.matmul %0, %13, %cst_12 {dimension_numbers = #tpu.dot_dimension_numbers<[1], [0], [0], [1], [0, 0, 1, 1], [], []>} : vector<8x4xf32>, vector<4x1024xf32>, vector<8x1024xf32> -> vector<8x1024xf32>
    %15 = arith.maximumf %11, %14 : vector<8x1024xf32>
    %c0_13 = arith.constant 0 : index
    %c0_14 = arith.constant 0 : index
    %16 = vector.load %arg4[%c0_13, %c0_14] : memref<8x1xf32, #tpu.memory_space<vmem>>, vector<8x1xf32>
    %17 = vector.broadcast %16 : vector<8x1xf32> to vector<8x1024xf32>
    %18 = arith.addf %15, %17 : vector<8x1024xf32>
    %cst_15 = arith.constant 0.000000e+00 : f32
    %19 = vector.broadcast %cst_15 : f32 to vector<8x1024xf32>
    %20 = arith.maximumf %18, %19 : vector<8x1024xf32>
    %c0_16 = arith.constant 0 : index
    %c0_17 = arith.constant 0 : index
    %21 = vector.load %arg2[%c0_16, %c0_17] : memref<1x1024xf32, #tpu.memory_space<vmem>>, vector<1x1024xf32>
    %22 = vector.broadcast %21 : vector<1x1024xf32> to vector<8x1024xf32>
    %23 = arith.mulf %20, %22 : vector<8x1024xf32>
    %c1_i32 = arith.constant 1 : i32
    %24 = tpu.dynamic_rotate %23 by %c1_i32 dim 1 : vector<8x1024xf32>, i32 -> vector<8x1024xf32>
    %c0_18 = arith.constant 0 : index
    %c0_19 = arith.constant 0 : index
    %25 = vector.load %arg5[%c0_18, %c0_19] : memref<16x8xf32, #tpu.memory_space<vmem>>, vector<16x8xf32>
    %cst_20 = arith.constant dense<0.000000e+00> : vector<16x1024xf32>
    %26 = tpu.matmul %25, %24, %cst_20 {dimension_numbers = #tpu.dot_dimension_numbers<[1], [0], [0], [1], [0, 0, 1, 1], [], []>} : vector<16x8xf32>, vector<8x1024xf32>, vector<16x1024xf32> -> vector<16x1024xf32>
    %c0_21 = arith.constant 0 : index
    %c0_22 = arith.constant 0 : index
    %27 = vector.load %arg6[%c0_21, %c0_22] : memref<16x8xf32, #tpu.memory_space<vmem>>, vector<16x8xf32>
    %cst_23 = arith.constant dense<0.000000e+00> : vector<16x1024xf32>
    %28 = tpu.matmul %27, %23, %cst_23 {dimension_numbers = #tpu.dot_dimension_numbers<[1], [0], [0], [1], [0, 0, 1, 1], [], []>} : vector<16x8xf32>, vector<8x1024xf32>, vector<16x1024xf32> -> vector<16x1024xf32>
    %29 = arith.addf %26, %28 : vector<16x1024xf32>
    %c0_24 = arith.constant 0 : index
    %c0_25 = arith.constant 0 : index
    %30 = vector.load %arg7[%c0_24, %c0_25] : memref<16x1xf32, #tpu.memory_space<vmem>>, vector<16x1xf32>
    %31 = vector.broadcast %30 : vector<16x1xf32> to vector<16x1024xf32>
    %32 = arith.addf %29, %31 : vector<16x1024xf32>
    %cst_26 = arith.constant 0.000000e+00 : f32
    %33 = vector.broadcast %cst_26 : f32 to vector<16x1024xf32>
    %34 = arith.maximumf %32, %33 : vector<16x1024xf32>
    %c0_27 = arith.constant 0 : index
    %c0_28 = arith.constant 0 : index
    %c0_29 = arith.constant 0 : index
    %35 = vector.load %arg8[%c0_27, %c0_28, %c0_29] : memref<1x16x1024xf32, #tpu.memory_space<vmem>>, vector<1x16x1024xf32>
    %36 = vector.shape_cast %35 : vector<1x16x1024xf32> to vector<16x1024xf32>
    %37 = vector.shape_cast %34 : vector<16x1024xf32> to vector<1x16x1024xf32>
    tpu.vector_store %arg8[%c0_27, %c0_28, %c0_29], %37 {strides = array<i32>} : memref<1x16x1024xf32, #tpu.memory_space<vmem>>, vector<1x16x1024xf32>,
    return
  }
  func.func @transform_0(%arg0: i32) -> (i32, i32, i32) {
    %c0_i32 = arith.constant 0 : i32
    %c0_i32_0 = arith.constant 0 : i32
    %c0_i32_1 = arith.constant 0 : i32
    return %arg0, %c0_i32, %c0_i32_0 : i32, i32, i32
  }
  func.func @transform_1(%arg0: i32) -> (i32, i32) {
    %c0_i32 = arith.constant 0 : i32
    %c0_i32_0 = arith.constant 0 : i32
    %c0_i32_1 = arith.constant 0 : i32
    return %c0_i32, %c0_i32_0 : i32, i32
  }
  func.func @transform_2(%arg0: i32) -> (i32, i32) {
    %c0_i32 = arith.constant 0 : i32
    %c0_i32_0 = arith.constant 0 : i32
    %c0_i32_1 = arith.constant 0 : i32
    return %c0_i32, %c0_i32_0 : i32, i32
  }
  func.func @transform_3(%arg0: i32) -> (i32, i32) {
    %c0_i32 = arith.constant 0 : i32
    %c0_i32_0 = arith.constant 0 : i32
    %c0_i32_1 = arith.constant 0 : i32
    return %c0_i32, %c0_i32_0 : i32, i32
  }
  func.func @transform_4(%arg0: i32) -> (i32, i32) {
    %c0_i32 = arith.constant 0 : i32
    %c0_i32_0 = arith.constant 0 : i32
    %c0_i32_1 = arith.constant 0 : i32
    return %c0_i32, %c0_i32_0 : i32, i32
  }
  func.func @transform_5(%arg0: i32) -> (i32, i32) {
    %c0_i32 = arith.constant 0 : i32
    %c0_i32_0 = arith.constant 0 : i32
    %c0_i32_1 = arith.constant 0 : i32
    return %c0_i32, %c0_i32_0 : i32, i32
  }
  func.func @transform_6(%arg0: i32) -> (i32, i32) {
    %c0_i32 = arith.constant 0 : i32
    %c0_i32_0 = arith.constant 0 : i32
    %c0_i32_1 = arith.constant 0 : i32
    return %c0_i32, %c0_i32_0 : i32, i32
  }
  func.func @transform_7(%arg0: i32) -> (i32, i32, i32) {
    %c0_i32 = arith.constant 0 : i32
    %c0_i32_0 = arith.constant 0 : i32
    %c0_i32_1 = arith.constant 0 : i32
    return %arg0, %c0_i32, %c0_i32_0 : i32, i32, i32
  }
}

module attributes {stable_mosaic.version = 11 : i64} {
  func.func @_fc_head_kernel(%arg0: i32, %arg1: memref<8x128xf32, #tpu.memory_space<vmem>>, %arg2: memref<128x256xbf16, #tpu.memory_space<vmem>>, %arg3: memref<1x256xf32, #tpu.memory_space<vmem>>, %arg4: memref<256x2xf32, #tpu.memory_space<vmem>>, %arg5: memref<1x2xf32, #tpu.memory_space<vmem>>, %arg6: memref<8x2xf32, #tpu.memory_space<vmem>>) attributes {dimension_semantics = [#tpu.dimension_semantics<parallel>], iteration_bounds = array<i64: 1>, scalar_prefetch = 0 : i64, scratch_operands = 0 : i64, tpu.core_type = #tpu.core_type<tc>, window_params = [{transform_indices = @transform_0, window_bounds = array<i64: 8, 128>}, {pipeline_mode = #tpu.pipeline_mode<synchronous>, transform_indices = @transform_1, window_bounds = array<i64: 128, 256>}, {pipeline_mode = #tpu.pipeline_mode<synchronous>, transform_indices = @transform_2, window_bounds = array<i64: 1, 256>}, {pipeline_mode = #tpu.pipeline_mode<synchronous>, transform_indices = @transform_3, window_bounds = array<i64: 256, 2>}, {pipeline_mode = #tpu.pipeline_mode<synchronous>, transform_indices = @transform_4, window_bounds = array<i64: 1, 2>}, {transform_indices = @transform_5, window_bounds = array<i64: 8, 2>}]} {
    %c0 = arith.constant 0 : index
    %c0_0 = arith.constant 0 : index
    %0 = vector.load %arg1[%c0, %c0_0] : memref<8x128xf32, #tpu.memory_space<vmem>>, vector<8x128xf32>
    %1 = arith.truncf %0 : vector<8x128xf32> to vector<8x128xbf16>
    %c0_1 = arith.constant 0 : index
    %c0_2 = arith.constant 0 : index
    %2 = vector.load %arg2[%c0_1, %c0_2] : memref<128x256xbf16, #tpu.memory_space<vmem>>, vector<128x256xbf16>
    %cst = arith.constant dense<0.000000e+00> : vector<8x256xf32>
    %3 = tpu.matmul %1, %2, %cst {dimension_numbers = #tpu.dot_dimension_numbers<[1], [0], [0], [1], [0, 0, 1, 1], [], []>} : vector<8x128xbf16>, vector<128x256xbf16>, vector<8x256xf32> -> vector<8x256xf32>
    %c0_3 = arith.constant 0 : index
    %c0_4 = arith.constant 0 : index
    %4 = vector.load %arg3[%c0_3, %c0_4] : memref<1x256xf32, #tpu.memory_space<vmem>>, vector<1x256xf32>
    %5 = vector.broadcast %4 : vector<1x256xf32> to vector<8x256xf32>
    %6 = arith.addf %3, %5 : vector<8x256xf32>
    %cst_5 = arith.constant 0.000000e+00 : f32
    %7 = vector.broadcast %cst_5 : f32 to vector<8x256xf32>
    %8 = arith.maximumf %6, %7 : vector<8x256xf32>
    %c0_6 = arith.constant 0 : index
    %c0_7 = arith.constant 0 : index
    %9 = vector.load %arg4[%c0_6, %c0_7] : memref<256x2xf32, #tpu.memory_space<vmem>>, vector<256x2xf32>
    %cst_8 = arith.constant dense<0.000000e+00> : vector<8x2xf32>
    %10 = tpu.matmul %8, %9, %cst_8 {dimension_numbers = #tpu.dot_dimension_numbers<[1], [0], [0], [1], [0, 0, 1, 1], [], []>} : vector<8x256xf32>, vector<256x2xf32>, vector<8x2xf32> -> vector<8x2xf32>
    %c0_9 = arith.constant 0 : index
    %c0_10 = arith.constant 0 : index
    %11 = vector.load %arg5[%c0_9, %c0_10] : memref<1x2xf32, #tpu.memory_space<vmem>>, vector<1x2xf32>
    %12 = vector.broadcast %11 : vector<1x2xf32> to vector<8x2xf32>
    %13 = arith.addf %10, %12 : vector<8x2xf32>
    %c0_11 = arith.constant 0 : index
    %c0_12 = arith.constant 0 : index
    %14 = vector.load %arg6[%c0_11, %c0_12] : memref<8x2xf32, #tpu.memory_space<vmem>>, vector<8x2xf32>
    tpu.vector_store %arg6[%c0_11, %c0_12], %13 {strides = array<i32>} : memref<8x2xf32, #tpu.memory_space<vmem>>, vector<8x2xf32>,
    return
  }
  func.func @transform_0(%arg0: i32) -> (i32, i32) {
    %c0_i32 = arith.constant 0 : i32
    %c0_i32_0 = arith.constant 0 : i32
    return %arg0, %c0_i32 : i32, i32
  }
  func.func @transform_1(%arg0: i32) -> (i32, i32) {
    %c0_i32 = arith.constant 0 : i32
    %c0_i32_0 = arith.constant 0 : i32
    %c0_i32_1 = arith.constant 0 : i32
    return %c0_i32, %c0_i32_0 : i32, i32
  }
  func.func @transform_2(%arg0: i32) -> (i32, i32) {
    %c0_i32 = arith.constant 0 : i32
    %c0_i32_0 = arith.constant 0 : i32
    %c0_i32_1 = arith.constant 0 : i32
    return %c0_i32, %c0_i32_0 : i32, i32
  }
  func.func @transform_3(%arg0: i32) -> (i32, i32) {
    %c0_i32 = arith.constant 0 : i32
    %c0_i32_0 = arith.constant 0 : i32
    %c0_i32_1 = arith.constant 0 : i32
    return %c0_i32, %c0_i32_0 : i32, i32
  }
  func.func @transform_4(%arg0: i32) -> (i32, i32) {
    %c0_i32 = arith.constant 0 : i32
    %c0_i32_0 = arith.constant 0 : i32
    %c0_i32_1 = arith.constant 0 : i32
    return %c0_i32, %c0_i32_0 : i32, i32
  }
  func.func @transform_5(%arg0: i32) -> (i32, i32) {
    %c0_i32 = arith.constant 0 : i32
    %c0_i32_0 = arith.constant 0 : i32
    return %arg0, %c0_i32 : i32, i32
  }
}

</mosaic_0001>

<llo_original>
// kernel: tile.8
$region0: #{tile.8}
  #allocation0 [shape = 's32[1]{0}', space=sflag, size = 0x4, scoped, tag = 'scoped memory for tile.8']
  %s0 = inlined_call_operand.vmem [shape: f32[128], index: 0, kind: input, shape index: {}]
  %s1 = inlined_call_operand.vmem [shape: f32[8,128], index: 1, kind: output, shape index: {}]
  // Predicated region
  $region2: #{tile.8} parent=0 // pred_check
    _
  $region3: #{tile.8} parent=0 // pred_check_branch
    %3 = sbr.rel (0) target = $region5
  $region4: #{tile.8} parent=0 // pred_region
    _
  $region5: #{tile.8} parent=0 // pred_fallthru
    _
  %v4 = vld [vmem:[%s0] ss:$0 sm:$0xff]
  %5 = vst [vmem:[%s1] sm:$0xff] %v4

// kernel: cnn1d_forward.3
$region0: #{cnn1d_forward.3}
  #allocation0 [shape = 'u32[]', space=smem, size = 0x4, offset = 0x4, fixed_abs, tag = 'smem constant byte address 0x4 - core index']
  #allocation1 [shape = 'u32[144,128]{1,0:T(1,128)}', space=vmem, size = 0x12000, scoped, tag = 'internal scratch']
  %s0 = inlined_call_operand.vmem [shape: f32[8,128], index: 0, kind: input, shape index: {}]
  %s1 = inlined_call_operand.vmem [shape: bf16[128,256], index: 1, kind: input, shape index: {}]
  %s2 = inlined_call_operand.vmem [shape: f32[1,256], index: 2, kind: input, shape index: {}]
  %s3 = inlined_call_operand.vmem [shape: f32[256,2], index: 3, kind: input, shape index: {}]
  %s4 = inlined_call_operand.vmem [shape: f32[1,2], index: 4, kind: input, shape index: {}]
  %s5 = inlined_call_operand.vmem [shape: f32[8,2], index: 5, kind: output, shape index: {}]
  %s6 = sld [smem:[#allocation0]]
  $region30: #{cnn1d_forward.3} parent=0
    _
  %s8 = ssub.s32 1, %s6
  %s9 = scalar_select 0, %s8, %s6
  // Predicated region
  $region2: #{cnn1d_forward.3} parent=0 // pred_check
    _
  $region3: #{cnn1d_forward.3} parent=0 // pred_check_branch
    %11 = sbr.rel (0) target = $region5
  $region4: #{cnn1d_forward.3} parent=0 // pred_region
    _
  $region5: #{cnn1d_forward.3} parent=0 // pred_fallthru
    _
  // Predicated region
  $region6: #{cnn1d_forward.3} parent=0 // pred_check
    _
  $region7: #{cnn1d_forward.3} parent=0 // pred_check_branch
    %13 = sbr.rel (0) target = $region9
  $region8: #{cnn1d_forward.3} parent=0 // pred_region
    _
  $region9: #{cnn1d_forward.3} parent=0 // pred_fallthru
    _
  // Predicated region
  $region10: #{cnn1d_forward.3} parent=0 // pred_check
    _
  $region11: #{cnn1d_forward.3} parent=0 // pred_check_branch
    %15 = sbr.rel (0) target = $region13
  $region12: #{cnn1d_forward.3} parent=0 // pred_region
    _
  $region13: #{cnn1d_forward.3} parent=0 // pred_fallthru
    _
  // Predicated region
  $region14: #{cnn1d_forward.3} parent=0 // pred_check
    _
  $region15: #{cnn1d_forward.3} parent=0 // pred_check_branch
    %17 = sbr.rel (0) target = $region17
  $region16: #{cnn1d_forward.3} parent=0 // pred_region
    _
  $region17: #{cnn1d_forward.3} parent=0 // pred_fallthru
    _
  // Predicated region
  $region18: #{cnn1d_forward.3} parent=0 // pred_check
    _
  $region19: #{cnn1d_forward.3} parent=0 // pred_check_branch
    %19 = sbr.rel (0) target = $region21
  $region20: #{cnn1d_forward.3} parent=0 // pred_region
    _
  $region21: #{cnn1d_forward.3} parent=0 // pred_fallthru
    _
  %v21 = vld [vmem:[%s0] sm:$0xff]
  %v22 = vpack.c.bf16 %v21, %v21
  %v23 = vld [vmem:[%s1] sm:$0xff]
  %v24 = vld [vmem:[%s1 + $0x8] sm:$0xff]
  %v25 = vld [vmem:[%s1 + $0x10] sm:$0xff]
  %v26 = vld [vmem:[%s1 + $0x18] sm:$0xff]
  %v27 = vld [vmem:[%s1 + $0x20] sm:$0xff]
  %v28 = vld [vmem:[%s1 + $0x28] sm:$0xff]
  %v29 = vld [vmem:[%s1 + $0x30] sm:$0xff]
  %v30 = vld [vmem:[%s1 + $0x38] sm:$0xff]
  %v31 = vld [vmem:[%s1 + $0x40] sm:$0xff]
  %v32 = vld [vmem:[%s1 + $0x48] sm:$0xff]
  %v33 = vld [vmem:[%s1 + $0x50] sm:$0xff]
  %v34 = vld [vmem:[%s1 + $0x58] sm:$0xff]
  %v35 = vld [vmem:[%s1 + $0x60] sm:$0xff]
  %v36 = vld [vmem:[%s1 + $0x68] sm:$0xff]
  %v37 = vld [vmem:[%s1 + $0x70] sm:$0xff]
  %v38 = vld [vmem:[%s1 + $0x78] sm:$0xff]
  %v39 = vld [vmem:[%s2] sm:$0x3]
  %v41 = vlaneseq
  %v42 = vshrl.u32 %v41, 7
  %v43 = vsub.s32 0, %v42
  %v44 = vrot.slane %v39, %v43
  %v45 = vlaneseq
  %v46 = vshrl.u32 %v45, 7
  %v47 = vsub.s32 1, %v46
  %v48 = vrot.slane %v39, %v47
  %v67 = vunpack.c.l.b16 %v23
  %v68 = vunpack.c.h.b16 %v23
  %v69 = vunpack.c.l.b16 %v24
  %v70 = vunpack.c.h.b16 %v24
  %v71 = vunpack.c.l.b16 %v25
  %v72 = vunpack.c.h.b16 %v25
  %v73 = vunpack.c.l.b16 %v26
  %v74 = vunpack.c.h.b16 %v26
  %v75 = vunpack.c.l.b16 %v27
  %v76 = vunpack.c.h.b16 %v27
  %v77 = vunpack.c.l.b16 %v28
  %v78 = vunpack.c.h.b16 %v28
  %v79 = vunpack.c.l.b16 %v29
  %v80 = vunpack.c.h.b16 %v29
  %v81 = vunpack.c.l.b16 %v30
  %v82 = vunpack.c.h.b16 %v30
  %v83 = vunpack.c.l.b16 %v31
  %v84 = vunpack.c.h.b16 %v31
  %v85 = vunpack.c.l.b16 %v32
  %v86 = vunpack.c.h.b16 %v32
  %v87 = vunpack.c.l.b16 %v33
  %v88 = vunpack.c.h.b16 %v33
  %v89 = vunpack.c.l.b16 %v34
  %v90 = vunpack.c.h.b16 %v34
  %v91 = vunpack.c.l.b16 %v35
  %v92 = vunpack.c.h.b16 %v35
  %v93 = vunpack.c.l.b16 %v36
  %v94 = vunpack.c.h.b16 %v36
  %v95 = vunpack.c.l.b16 %v37
  %v96 = vunpack.c.h.b16 %v37
  %v97 = vunpack.c.l.b16 %v38
  %v98 = vunpack.c.h.b16 %v38
  %v99 = vpack.c.b16 %v69, %v67
  %v100 = vpack.c.b16 %v70, %v68
  %v101 = vpack.c.b16 %v73, %v71
  %v102 = vpack.c.b16 %v74, %v72
  %v103 = vpack.c.b16 %v77, %v75
  %v104 = vpack.c.b16 %v78, %v76
  %v105 = vpack.c.b16 %v81, %v79
  %v106 = vpack.c.b16 %v82, %v80
  %v107 = vpack.c.b16 %v85, %v83
  %v108 = vpack.c.b16 %v86, %v84
  %v109 = vpack.c.b16 %v89, %v87
  %v110 = vpack.c.b16 %v90, %v88
  %v111 = vpack.c.b16 %v93, %v91
  %v112 = vpack.c.b16 %v94, %v92
  %v113 = vpack.c.b16 %v97, %v95
  %v114 = vpack.c.b16 %v98, %v96
  %131 = vmatprep.subr.bf16.mxu0 %v100
  %132 = vmatpush1.bf16.msra.mxu0 %v99
  %133 = vmatprep.subr.bf16.mxu0 %v102
  %134 = vmatpush1.bf16.msra.mxu0 %v101
  %135 = vmatprep.subr.bf16.mxu0 %v104
  %136 = vmatpush1.bf16.msra.mxu0 %v103
  %137 = vmatprep.subr.bf16.mxu0 %v106
  %138 = vmatpush1.bf16.msra.mxu0 %v105
  %139 = vmatprep.subr.bf16.mxu0 %v108
  %140 = vmatpush1.bf16.msra.mxu0 %v107
  %141 = vmatprep.subr.bf16.mxu0 %v110
  %142 = vmatpush1.bf16.msra.mxu0 %v109
  %143 = vmatprep.subr.bf16.mxu0 %v112
  %144 = vmatpush1.bf16.msra.mxu0 %v111
  %145 = vmatprep.subr.bf16.mxu0 %v114
  %146 = vmatpush1.bf16.msra.mxu0 %v113
  %147 = vmatprep.subr.bf16.mxu0 0
  %148 = vmatpush1.bf16.msra.mxu0 0
  %149 = vmatprep.subr.bf16.mxu0 0
  %150 = vmatpush1.bf16.msra.mxu0 0
  %151 = vmatprep.subr.bf16.mxu0 0
  %152 = vmatpush1.bf16.msra.mxu0 0
  %153 = vmatprep.subr.bf16.mxu0 0
  %154 = vmatpush1.bf16.msra.mxu0 0
  %155 = vmatprep.subr.bf16.mxu0 0
  %156 = vmatpush1.bf16.msra.mxu0 0
  %157 = vmatprep.subr.bf16.mxu0 0
  %158 = vmatpush1.bf16.msra.mxu0 0
  %159 = vmatprep.subr.bf16.mxu0 0
  %160 = vmatpush1.bf16.msra.mxu0 0
  %161 = vmatprep.subr.bf16.mxu0 0
  %162 = vmatpush1.bf16.msra.mxu0 0
  %163 = vmatprep.mubr.bf16.mxu0 0
  %164 = vmatmul.mubr.bf16.gmra.mrb[0].mxu0 %v22
  %v165 = vpop.f32.mrb[0].mxu0
  %v166 = vadd.f32 %v44, %v165
  %v167 = vpop.f32.mrb[0].mxu0
  %v168 = vadd.f32 %v48, %v167
  %v169 = vpop.f32.mrb[0].mxu0
  %v170 = vpop.f32.mrb[0].mxu0
  %171 = vdwg.mxu0
  %v172 = vmax.f32 %v166, 0.0
  %v173 = vmax.f32 %v168, 0.0
  %v174 = vld [vmem:[%s3] sm:$0xff]
  %v175 = vld [vmem:[%s3 + $0x8] sm:$0xff]
  %v176 = vld [vmem:[%s3 + $0x10] sm:$0xff]
  %v177 = vld [vmem:[%s3 + $0x18] sm:$0xff]
  %v178 = vld [vmem:[%s3 + $0x20] sm:$0xff]
  %v179 = vld [vmem:[%s3 + $0x28] sm:$0xff]
  %v180 = vld [vmem:[%s3 + $0x30] sm:$0xff]
  %v181 = vld [vmem:[%s3 + $0x38] sm:$0xff]
  %v182 = vld [vmem:[%s3 + $0x40] sm:$0xff]
  %v183 = vld [vmem:[%s3 + $0x48] sm:$0xff]
  %v184 = vld [vmem:[%s3 + $0x50] sm:$0xff]
  %v185 = vld [vmem:[%s3 + $0x58] sm:$0xff]
  %v186 = vld [vmem:[%s3 + $0x60] sm:$0xff]
  %v187 = vld [vmem:[%s3 + $0x68] sm:$0xff]
  %v188 = vld [vmem:[%s3 + $0x70] sm:$0xff]
  %v189 = vld [vmem:[%s3 + $0x78] sm:$0xff]
  %v190 = vld [vmem:[%s3 + $0x80] sm:$0xff]
  %v191 = vld [vmem:[%s3 + $0x88] sm:$0xff]
  %v192 = vld [vmem:[%s3 + $0x90] sm:$0xff]
  %v193 = vld [vmem:[%s3 + $0x98] sm:$0xff]
  %v194 = vld [vmem:[%s3 + $0xa0] sm:$0xff]
  %v195 = vld [vmem:[%s3 + $0xa8] sm:$0xff]
  %v196 = vld [vmem:[%s3 + $0xb0] sm:$0xff]
  %v197 = vld [vmem:[%s3 + $0xb8] sm:$0xff]
  %v198 = vld [vmem:[%s3 + $0xc0] sm:$0xff]
  %v199 = vld [vmem:[%s3 + $0xc8] sm:$0xff]
  %v200 = vld [vmem:[%s3 + $0xd0] sm:$0xff]
  %v201 = vld [vmem:[%s3 + $0xd8] sm:$0xff]
  %v202 = vld [vmem:[%s3 + $0xe0] sm:$0xff]
  %v203 = vld [vmem:[%s3 + $0xe8] sm:$0xff]
  %v204 = vld [vmem:[%s3 + $0xf0] sm:$0xff]
  %v205 = vld [vmem:[%s3 + $0xf8] sm:$0xff]
  %v206 = vld [vmem:[%s4] sm:$0x1]
  %v208 = vlaneseq
  %v209 = vshrl.u32 %v208, 7
  %v210 = vsub.s32 0, %v209
  %v211 = vrot.slane %v206, %v210
  %213 = vmatprep.subr.mxu0 0.0
  %214 = vmatpush1.msra.mxu0 %v174
  %215 = vmatprep.subr.mxu0 0.0
  %216 = vmatpush1.msra.mxu0 %v175
  %217 = vmatprep.subr.mxu0 0.0
  %218 = vmatpush1.msra.mxu0 %v176
  %219 = vmatprep.subr.mxu0 0.0
  %220 = vmatpush1.msra.mxu0 %v177
  %221 = vmatprep.subr.mxu0 0.0
  %222 = vmatpush1.msra.mxu0 %v178
  %223 = vmatprep.subr.mxu0 0.0
  %224 = vmatpush1.msra.mxu0 %v179
  %225 = vmatprep.subr.mxu0 0.0
  %226 = vmatpush1.msra.mxu0 %v180
  %227 = vmatprep.subr.mxu0 0.0
  %228 = vmatpush1.msra.mxu0 %v181
  %229 = vmatprep.subr.mxu0 0.0
  %230 = vmatpush1.msra.mxu0 %v182
  %231 = vmatprep.subr.mxu0 0.0
  %232 = vmatpush1.msra.mxu0 %v183
  %233 = vmatprep.subr.mxu0 0.0
  %234 = vmatpush1.msra.mxu0 %v184
  %235 = vmatprep.subr.mxu0 0.0
  %236 = vmatpush1.msra.mxu0 %v185
  %237 = vmatprep.subr.mxu0 0.0
  %238 = vmatpush1.msra.mxu0 %v186
  %239 = vmatprep.subr.mxu0 0.0
  %240 = vmatpush1.msra.mxu0 %v187
  %241 = vmatprep.subr.mxu0 0.0
  %242 = vmatpush1.msra.mxu0 %v188
  %243 = vmatprep.subr.mxu0 0.0
  %244 = vmatpush1.msra.mxu0 %v189
  %245 = vmatprep.subr.mxu0 0.0
  %246 = vmatpush1.msra.mxu0 %v190
  %247 = vmatprep.subr.mxu0 0.0
  %248 = vmatpush1.msra.mxu0 %v191
  %249 = vmatprep.subr.mxu0 0.0
  %250 = vmatpush1.msra.mxu0 %v192
  %251 = vmatprep.subr.mxu0 0.0
  %252 = vmatpush1.msra.mxu0 %v193
  %253 = vmatprep.subr.mxu0 0.0
  %254 = vmatpush1.msra.mxu0 %v194
  %255 = vmatprep.subr.mxu0 0.0
  %256 = vmatpush1.msra.mxu0 %v195
  %257 = vmatprep.subr.mxu0 0.0
  %258 = vmatpush1.msra.mxu0 %v196
  %259 = vmatprep.subr.mxu0 0.0
  %260 = vmatpush1.msra.mxu0 %v197
  %261 = vmatprep.subr.mxu0 0.0
  %262 = vmatpush1.msra.mxu0 %v198
  %263 = vmatprep.subr.mxu0 0.0
  %264 = vmatpush1.msra.mxu0 %v199
  %265 = vmatprep.subr.mxu0 0.0
  %266 = vmatpush1.msra.mxu0 %v200
  %267 = vmatprep.subr.mxu0 0.0
  %268 = vmatpush1.msra.mxu0 %v201
  %269 = vmatprep.subr.mxu0 0.0
  %270 = vmatpush1.msra.mxu0 %v202
  %271 = vmatprep.subr.mxu0 0.0
  %272 = vmatpush1.msra.mxu0 %v203
  %273 = vmatprep.subr.mxu0 0.0
  %274 = vmatpush1.msra.mxu0 %v204
  %275 = vmatprep.subr.mxu0 0.0
  %276 = vmatpush1.msra.mxu0 %v205
  %277 = vmatprep.mubr.f32.mxu0 %v173
  %278 = vmatmul.mubr.f32.gmra.mrb[0].mxu0 %v172
  %v279 = vpop.f32.mrb[0].mxu0
  %v280 = vadd.f32 %v211, %v279
  %v281 = vpop.f32.mrb[0].mxu0
  %282 = vdwg.mxu0
  %vm283 = vcmask 15360
  %284 = vst.msk [vmem:[%s5] sm:$0xff] %vm283, %v280
  // Predicated region
  $region22: #{cnn1d_forward.3} parent=0 // pred_check
    _
  $region23: #{cnn1d_forward.3} parent=0 // pred_check_branch
    %286 = sbr.rel (0) target = $region25
  $region24: #{cnn1d_forward.3} parent=0 // pred_region
    _
  $region25: #{cnn1d_forward.3} parent=0 // pred_fallthru
    _
  // Predicated region
  $region26: #{cnn1d_forward.3} parent=0 // pred_check
    _
  $region27: #{cnn1d_forward.3} parent=0 // pred_check_branch
    %288 = sbr.rel (0) target = $region29
  $region28: #{cnn1d_forward.3} parent=0 // pred_region
    _
  $region29: #{cnn1d_forward.3} parent=0 // pred_fallthru
    _

// kernel: cnn1d_forward.2
$region0: #{cnn1d_forward.2}
  #allocation0 [shape = 'u32[]', space=smem, size = 0x4, offset = 0x4, fixed_abs, tag = 'smem constant byte address 0x4 - core index']
  #allocation1 [shape = 'u32[144,128]{1,0:T(1,128)}', space=vmem, size = 0x12000, scoped, tag = 'internal scratch']
  %s0 = inlined_call_operand.vmem [shape: f32[1,16,1024], index: 0, kind: input, shape index: {}]
  %s1 = inlined_call_operand.vmem [shape: f32[1,1024], index: 1, kind: input, shape index: {}]
  %s2 = inlined_call_operand.vmem [shape: f32[8,4], index: 2, kind: input, shape index: {}]
  %s3 = inlined_call_operand.vmem [shape: f32[8,1], index: 3, kind: input, shape index: {}]
  %s4 = inlined_call_operand.vmem [shape: f32[16,8], index: 4, kind: input, shape index: {}]
  %s5 = inlined_call_operand.vmem [shape: f32[16,8], index: 5, kind: input, shape index: {}]
  %s6 = inlined_call_operand.vmem [shape: f32[16,1], index: 6, kind: input, shape index: {}]
  %s7 = inlined_call_operand.vmem [shape: f32[1,16,1024], index: 7, kind: output, shape index: {}]
  %s8 = sld [smem:[#allocation0]]
  $region38: #{cnn1d_forward.2} parent=0
    _
  %s10 = ssub.s32 1, %s8
  %s11 = scalar_select 0, %s10, %s8
  // Predicated region
  $region2: #{cnn1d_forward.2} parent=0 // pred_check
    _
  $region3: #{cnn1d_forward.2} parent=0 // pred_check_branch
    %13 = sbr.rel (0) target = $region5
  $region4: #{cnn1d_forward.2} parent=0 // pred_region
    _
  $region5: #{cnn1d_forward.2} parent=0 // pred_fallthru
    _
  // Predicated region
  $region6: #{cnn1d_forward.2} parent=0 // pred_check
    _
  $region7: #{cnn1d_forward.2} parent=0 // pred_check_branch
    %15 = sbr.rel (0) target = $region9
  $region8: #{cnn1d_forward.2} parent=0 // pred_region
    _
  $region9: #{cnn1d_forward.2} parent=0 // pred_fallthru
    _
  // Predicated region
  $region10: #{cnn1d_forward.2} parent=0 // pred_check
    _
  $region11: #{cnn1d_forward.2} parent=0 // pred_check_branch
    %17 = sbr.rel (0) target = $region13
  $region12: #{cnn1d_forward.2} parent=0 // pred_region
    _
  $region13: #{cnn1d_forward.2} parent=0 // pred_fallthru
    _
  // Predicated region
  $region14: #{cnn1d_forward.2} parent=0 // pred_check
    _
  $region15: #{cnn1d_forward.2} parent=0 // pred_check_branch
    %19 = sbr.rel (0) target = $region17
  $region16: #{cnn1d_forward.2} parent=0 // pred_region
    _
  $region17: #{cnn1d_forward.2} parent=0 // pred_fallthru
    _
  // Predicated region
  $region18: #{cnn1d_forward.2} parent=0 // pred_check
    _
  $region19: #{cnn1d_forward.2} parent=0 // pred_check_branch
    %21 = sbr.rel (0) target = $region21
  $region20: #{cnn1d_forward.2} parent=0 // pred_region
    _
  $region21: #{cnn1d_forward.2} parent=0 // pred_fallthru
    _
  // Predicated region
  $region22: #{cnn1d_forward.2} parent=0 // pred_check
    _
  $region23: #{cnn1d_forward.2} parent=0 // pred_check_branch
    %23 = sbr.rel (0) target = $region25
  $region24: #{cnn1d_forward.2} parent=0 // pred_region
    _
  $region25: #{cnn1d_forward.2} parent=0 // pred_fallthru
    _
  // Predicated region
  $region26: #{cnn1d_forward.2} parent=0 // pred_check
    _
  $region27: #{cnn1d_forward.2} parent=0 // pred_check_branch
    %25 = sbr.rel (0) target = $region29
  $region28: #{cnn1d_forward.2} parent=0 // pred_region
    _
  $region29: #{cnn1d_forward.2} parent=0 // pred_fallthru
    _
  %v26 = vld [vmem:[%s2] sm:$0xff]
  %v27 = vld [vmem:[%s0] sm:$0xf]
  %v28 = vld [vmem:[%s0 + $0x8] sm:$0xf]
  %v29 = vld [vmem:[%s0 + $0x10] sm:$0xf]
  %v30 = vld [vmem:[%s0 + $0x18] sm:$0xf]
  %v31 = vld [vmem:[%s0 + $0x20] sm:$0xf]
  %v32 = vld [vmem:[%s0 + $0x28] sm:$0xf]
  %v33 = vld [vmem:[%s0 + $0x30] sm:$0xf]
  %v34 = vld [vmem:[%s0 + $0x38] sm:$0xf]
  %vm35 = vcmask 31744
  %v37 = vsel %vm35, %v26, 0
  %vm39 = vcmask 1043456
  %v41 = vsel %vm39, %v27, 0
  %v44 = vsel %vm39, %v28, 0
  %v47 = vsel %vm39, %v29, 0
  %v50 = vsel %vm39, %v30, 0
  %v53 = vsel %vm39, %v31, 0
  %v56 = vsel %vm39, %v32, 0
  %v59 = vsel %vm39, %v33, 0
  %v62 = vsel %vm39, %v34, 0
  %64 = vmatprep.subr.mxu0 %v44
  %65 = vmatpush1.msra.mxu0 %v41
  %66 = vmatprep.subr.mxu0 0.0
  %67 = vmatpush1.msra.mxu0 0.0
  %68 = vmatprep.subr.mxu0 0.0
  %69 = vmatpush1.msra.mxu0 0.0
  %70 = vmatprep.subr.mxu0 0.0
  %71 = vmatpush1.msra.mxu0 0.0
  %72 = vmatprep.subr.mxu0 0.0
  %73 = vmatpush1.msra.mxu0 0.0
  %74 = vmatprep.subr.mxu0 0.0
  %75 = vmatpush1.msra.mxu0 0.0
  %76 = vmatprep.subr.mxu0 0.0
  %77 = vmatpush1.msra.mxu0 0.0
  %78 = vmatprep.subr.mxu0 0.0
  %79 = vmatpush1.msra.mxu0 0.0
  %80 = vmatprep.subr.mxu0 0.0
  %81 = vmatpush1.msra.mxu0 0.0
  %82 = vmatprep.subr.mxu0 0.0
  %83 = vmatpush1.msra.mxu0 0.0
  %84 = vmatprep.subr.mxu0 0.0
  %85 = vmatpush1.msra.mxu0 0.0
  %86 = vmatprep.subr.mxu0 0.0
  %87 = vmatpush1.msra.mxu0 0.0
  %88 = vmatprep.subr.mxu0 0.0
  %89 = vmatpush1.msra.mxu0 0.0
  %90 = vmatprep.subr.mxu0 0.0
  %91 = vmatpush1.msra.mxu0 0.0
  %92 = vmatprep.subr.mxu0 0.0
  %93 = vmatpush1.msra.mxu0 0.0
  %94 = vmatprep.subr.mxu0 0.0
  %95 = vmatpush1.msra.mxu0 0.0
  %96 = vmatprep.subr.mxu0 0.0
  %97 = vmatpush1.msra.mxu0 0.0
  %98 = vmatprep.subr.mxu0 0.0
  %99 = vmatpush1.msra.mxu0 0.0
  %100 = vmatprep.subr.mxu0 0.0
  %101 = vmatpush1.msra.mxu0 0.0
  %102 = vmatprep.subr.mxu0 0.0
  %103 = vmatpush1.msra.mxu0 0.0
  %104 = vmatprep.subr.mxu0 0.0
  %105 = vmatpush1.msra.mxu0 0.0
  %106 = vmatprep.subr.mxu0 0.0
  %107 = vmatpush1.msra.mxu0 0.0
  %108 = vmatprep.subr.mxu0 0.0
  %109 = vmatpush1.msra.mxu0 0.0
  %110 = vmatprep.subr.mxu0 0.0
  %111 = vmatpush1.msra.mxu0 0.0
  %112 = vmatprep.subr.mxu0 0.0
  %113 = vmatpush1.msra.mxu0 0.0
  %114 = vmatprep.subr.mxu0 0.0
  %115 = vmatpush1.msra.mxu0 0.0
  %116 = vmatprep.subr.mxu0 0.0
  %117 = vmatpush1.msra.mxu0 0.0
  %118 = vmatprep.subr.mxu0 0.0
  %119 = vmatpush1.msra.mxu0 0.0
  %120 = vmatprep.subr.mxu0 0.0
  %121 = vmatpush1.msra.mxu0 0.0
  %122 = vmatprep.subr.mxu0 0.0
  %123 = vmatpush1.msra.mxu0 0.0
  %124 = vmatprep.subr.mxu0 0.0
  %125 = vmatpush1.msra.mxu0 0.0
  %126 = vmatprep.subr.mxu0 0.0
  %127 = vmatpush1.msra.mxu0 0.0
  %128 = vmatprep.mubr.f32.mxu0 0.0
  %129 = vmatmul.mubr.f32.gmra.mrb[0].mxu0 %v37
  %v130 = vpop.f32.mrb[0].mxu0
  %v131 = vadd.f32 0.0, %v130
  %v132 = vpop.f32.mrb[0].mxu0
  %v133 = vadd.f32 0.0, %v132
  %134 = vdwg.mxu0
  %135 = vmatprep.subr.mxu0 %v50
  %136 = vmatpush1.msra.mxu0 %v47
  %137 = vmatprep.subr.mxu0 0.0
  %138 = vmatpush1.msra.mxu0 0.0
  %139 = vmatprep.subr.mxu0 0.0
  %140 = vmatpush1.msra.mxu0 0.0
  %141 = vmatprep.subr.mxu0 0.0
  %142 = vmatpush1.msra.mxu0 0.0
  %143 = vmatprep.subr.mxu0 0.0
  %144 = vmatpush1.msra.mxu0 0.0
  %145 = vmatprep.subr.mxu0 0.0
  %146 = vmatpush1.msra.mxu0 0.0
  %147 = vmatprep.subr.mxu0 0.0
  %148 = vmatpush1.msra.mxu0 0.0
  %149 = vmatprep.subr.mxu0 0.0
  %150 = vmatpush1.msra.mxu0 0.0
  %151 = vmatprep.subr.mxu0 0.0
  %152 = vmatpush1.msra.mxu0 0.0
  %153 = vmatprep.subr.mxu0 0.0
  %154 = vmatpush1.msra.mxu0 0.0
  %155 = vmatprep.subr.mxu0 0.0
  %156 = vmatpush1.msra.mxu0 0.0
  %157 = vmatprep.subr.mxu0 0.0
  %158 = vmatpush1.msra.mxu0 0.0
  %159 = vmatprep.subr.mxu0 0.0
  %160 = vmatpush1.msra.mxu0 0.0
  %161 = vmatprep.subr.mxu0 0.0
  %162 = vmatpush1.msra.mxu0 0.0
  %163 = vmatprep.subr.mxu0 0.0
  %164 = vmatpush1.msra.mxu0 0.0
  %165 = vmatprep.subr.mxu0 0.0
  %166 = vmatpush1.msra.mxu0 0.0
  %167 = vmatprep.subr.mxu0 0.0
  %168 = vmatpush1.msra.mxu0 0.0
  %169 = vmatprep.subr.mxu0 0.0
  %170 = vmatpush1.msra.mxu0 0.0
  %171 = vmatprep.subr.mxu0 0.0
  %172 = vmatpush1.msra.mxu0 0.0
  %173 = vmatprep.subr.mxu0 0.0
  %174 = vmatpush1.msra.mxu0 0.0
  %175 = vmatprep.subr.mxu0 0.0
  %176 = vmatpush1.msra.mxu0 0.0
  %177 = vmatprep.subr.mxu0 0.0
  %178 = vmatpush1.msra.mxu0 0.0
  %179 = vmatprep.subr.mxu0 0.0
  %180 = vmatpush1.msra.mxu0 0.0
  %181 = vmatprep.subr.mxu0 0.0
  %182 = vmatpush1.msra.mxu0 0.0
  %183 = vmatprep.subr.mxu0 0.0
  %184 = vmatpush1.msra.mxu0 0.0
  %185 = vmatprep.subr.mxu0 0.0
  %186 = vmatpush1.msra.mxu0 0.0
  %187 = vmatprep.subr.mxu0 0.0
  %188 = vmatpush1.msra.mxu0 0.0
  %189 = vmatprep.subr.mxu0 0.0
  %190 = vmatpush1.msra.mxu0 0.0
  %191 = vmatprep.subr.mxu0 0.0
  %192 = vmatpush1.msra.mxu0 0.0
  %193 = vmatprep.subr.mxu0 0.0
  %194 = vmatpush1.msra.mxu0 0.0
  %195 = vmatprep.subr.mxu0 0.0
  %196 = vmatpush1.msra.mxu0 0.0
  %197 = vmatprep.subr.mxu0 0.0
  %198 = vmatpush1.msra.mxu0 0.0
  %199 = vmatprep.mubr.f32.mxu0 0.0
  %200 = vmatmul.mubr.f32.gmra.mrb[0].mxu0 %v37
  %v201 = vpop.f32.mrb[0].mxu0
  %v202 = vadd.f32 0.0, %v201
  %v203 = vpop.f32.mrb[0].mxu0
  %v204 = vadd.f32 0.0, %v203
  %205 = vdwg.mxu0
  %206 = vmatprep.subr.mxu0 %v56
  %207 = vmatpush1.msra.mxu0 %v53
  %208 = vmatprep.subr.mxu0 0.0
  %209 = vmatpush1.msra.mxu0 0.0
  %210 = vmatprep.subr.mxu0 0.0
  %211 = vmatpush1.msra.mxu0 0.0
  %212 = vmatprep.subr.mxu0 0.0
  %213 = vmatpush1.msra.mxu0 0.0
  %214 = vmatprep.subr.mxu0 0.0
  %215 = vmatpush1.msra.mxu0 0.0
  %216 = vmatprep.subr.mxu0 0.0
  %217 = vmatpush1.msra.mxu0 0.0
  %218 = vmatprep.subr.mxu0 0.0
  %219 = vmatpush1.msra.mxu0 0.0
  %220 = vmatprep.subr.mxu0 0.0
  %221 = vmatpush1.msra.mxu0 0.0
  %222 = vmatprep.subr.mxu0 0.0
  %223 = vmatpush1.msra.mxu0 0.0
  %224 = vmatprep.subr.mxu0 0.0
  %225 = vmatpush1.msra.mxu0 0.0
  %226 = vmatprep.subr.mxu0 0.0
  %227 = vmatpush1.msra.mxu0 0.0
  %228 = vmatprep.subr.mxu0 0.0
  %229 = vmatpush1.msra.mxu0 0.0
  %230 = vmatprep.subr.mxu0 0.0
  %231 = vmatpush1.msra.mxu0 0.0
  %232 = vmatprep.subr.mxu0 0.0
  %233 = vmatpush1.msra.mxu0 0.0
  %234 = vmatprep.subr.mxu0 0.0
  %235 = vmatpush1.msra.mxu0 0.0
  %236 = vmatprep.subr.mxu0 0.0
  %237 = vmatpush1.msra.mxu0 0.0
  %238 = vmatprep.subr.mxu0 0.0
  %239 = vmatpush1.msra.mxu0 0.0
  %240 = vmatprep.subr.mxu0 0.0
  %241 = vmatpush1.msra.mxu0 0.0
  %242 = vmatprep.subr.mxu0 0.0
  %243 = vmatpush1.msra.mxu0 0.0
  %244 = vmatprep.subr.mxu0 0.0
  %245 = vmatpush1.msra.mxu0 0.0
  %246 = vmatprep.subr.mxu0 0.0
  %247 = vmatpush1.msra.mxu0 0.0
  %248 = vmatprep.subr.mxu0 0.0
  %249 = vmatpush1.msra.mxu0 0.0
  %250 = vmatprep.subr.mxu0 0.0
  %251 = vmatpush1.msra.mxu0 0.0
  %252 = vmatprep.subr.mxu0 0.0
  %253 = vmatpush1.msra.mxu0 0.0
  %254 = vmatprep.subr.mxu0 0.0
  %255 = vmatpush1.msra.mxu0 0.0
  %256 = vmatprep.subr.mxu0 0.0
  %257 = vmatpush1.msra.mxu0 0.0
  %258 = vmatprep.subr.mxu0 0.0
  %259 = vmatpush1.msra.mxu0 0.0
  %260 = vmatprep.subr.mxu0 0.0
  %261 = vmatpush1.msra.mxu0 0.0
  %262 = vmatprep.subr.mxu0 0.0
  %263 = vmatpush1.msra.mxu0 0.0
  %264 = vmatprep.subr.mxu0 0.0
  %265 = vmatpush1.msra.mxu0 0.0
  %266 = vmatprep.subr.mxu0 0.0
  %267 = vmatpush1.msra.mxu0 0.0
  %268 = vmatprep.subr.mxu0 0.0
  %269 = vmatpush1.msra.mxu0 0.0
  %270 = vmatprep.mubr.f32.mxu0 0.0
  %271 = vmatmul.mubr.f32.gmra.mrb[0].mxu0 %v37
  %v272 = vpop.f32.mrb[0].mxu0
  %v273 = vadd.f32 0.0, %v272
  %v274 = vpop.f32.mrb[0].mxu0
  %v275 = vadd.f32 0.0, %v274
  %276 = vdwg.mxu0
  %277 = vmatprep.subr.mxu0 %v62
  %278 = vmatpush1.msra.mxu0 %v59
  %279 = vmatprep.subr.mxu0 0.0
  %280 = vmatpush1.msra.mxu0 0.0
  %281 = vmatprep.subr.mxu0 0.0
  %282 = vmatpush1.msra.mxu0 0.0
  %283 = vmatprep.subr.mxu0 0.0
  %284 = vmatpush1.msra.mxu0 0.0
  %285 = vmatprep.subr.mxu0 0.0
  %286 = vmatpush1.msra.mxu0 0.0
  %287 = vmatprep.subr.mxu0 0.0
  %288 = vmatpush1.msra.mxu0 0.0
  %289 = vmatprep.subr.mxu0 0.0
  %290 = vmatpush1.msra.mxu0 0.0
  %291 = vmatprep.subr.mxu0 0.0
  %292 = vmatpush1.msra.mxu0 0.0
  %293 = vmatprep.subr.mxu0 0.0
  %294 = vmatpush1.msra.mxu0 0.0
  %295 = vmatprep.subr.mxu0 0.0
  %296 = vmatpush1.msra.mxu0 0.0
  %297 = vmatprep.subr.mxu0 0.0
  %298 = vmatpush1.msra.mxu0 0.0
  %299 = vmatprep.subr.mxu0 0.0
  %300 = vmatpush1.msra.mxu0 0.0
  %301 = vmatprep.subr.mxu0 0.0
  %302 = vmatpush1.msra.mxu0 0.0
  %303 = vmatprep.subr.mxu0 0.0
  %304 = vmatpush1.msra.mxu0 0.0
  %305 = vmatprep.subr.mxu0 0.0
  %306 = vmatpush1.msra.mxu0 0.0
  %307 = vmatprep.subr.mxu0 0.0
  %308 = vmatpush1.msra.mxu0 0.0
  %309 = vmatprep.subr.mxu0 0.0
  %310 = vmatpush1.msra.mxu0 0.0
  %311 = vmatprep.subr.mxu0 0.0
  %312 = vmatpush1.msra.mxu0 0.0
  %313 = vmatprep.subr.mxu0 0.0
  %314 = vmatpush1.msra.mxu0 0.0
  %315 = vmatprep.subr.mxu0 0.0
  %316 = vmatpush1.msra.mxu0 0.0
  %317 = vmatprep.subr.mxu0 0.0
  %318 = vmatpush1.msra.mxu0 0.0
  %319 = vmatprep.subr.mxu0 0.0
  %320 = vmatpush1.msra.mxu0 0.0
  %321 = vmatprep.subr.mxu0 0.0
  %322 = vmatpush1.msra.mxu0 0.0
  %323 = vmatprep.subr.mxu0 0.0
  %324 = vmatpush1.msra.mxu0 0.0
  %325 = vmatprep.subr.mxu0 0.0
  %326 = vmatpush1.msra.mxu0 0.0
  %327 = vmatprep.subr.mxu0 0.0
  %328 = vmatpush1.msra.mxu0 0.0
  %329 = vmatprep.subr.mxu0 0.0
  %330 = vmatpush1.msra.mxu0 0.0
  %331 = vmatprep.subr.mxu0 0.0
  %332 = vmatpush1.msra.mxu0 0.0
  %333 = vmatprep.subr.mxu0 0.0
  %334 = vmatpush1.msra.mxu0 0.0
  %335 = vmatprep.subr.mxu0 0.0
  %336 = vmatpush1.msra.mxu0 0.0
  %337 = vmatprep.subr.mxu0 0.0
  %338 = vmatpush1.msra.mxu0 0.0
  %339 = vmatprep.subr.mxu0 0.0
  %340 = vmatpush1.msra.mxu0 0.0
  %341 = vmatprep.mubr.f32.mxu0 0.0
  %342 = vmatmul.mubr.f32.gmra.mrb[0].mxu0 %v37
  %v343 = vpop.f32.mrb[0].mxu0
  %v344 = vadd.f32 0.0, %v343
  %v345 = vpop.f32.mrb[0].mxu0
  %v346 = vadd.f32 0.0, %v345
  %347 = vdwg.mxu0
  %v348 = vld [vmem:[%s0] sm:$0xf0]
  %v349 = vld [vmem:[%s0 + $0x8] sm:$0xf0]
  %v350 = vld [vmem:[%s0 + $0x10] sm:$0xf0]
  %v351 = vld [vmem:[%s0 + $0x18] sm:$0xf0]
  %v352 = vld [vmem:[%s0 + $0x20] sm:$0xf0]
  %v353 = vld [vmem:[%s0 + $0x28] sm:$0xf0]
  %v354 = vld [vmem:[%s0 + $0x30] sm:$0xf0]
  %v355 = vld [vmem:[%s0 + $0x38] sm:$0xf0]
  %v364 = vrot.slane %v348, 4
  %v365 = vrot.slane %v349, 4
  %v366 = vrot.slane %v350, 4
  %v367 = vrot.slane %v351, 4
  %v368 = vrot.slane %v352, 4
  %v369 = vrot.slane %v353, 4
  %v370 = vrot.slane %v354, 4
  %v371 = vrot.slane %v355, 4
  %v372 = vsel %vm39, %v364, 0
  %v374 = vsel %vm39, %v365, 0
  %v376 = vsel %vm39, %v366, 0
  %v378 = vsel %vm39, %v367, 0
  %v380 = vsel %vm39, %v368, 0
  %v382 = vsel %vm39, %v369, 0
  %v384 = vsel %vm39, %v370, 0
  %v386 = vsel %vm39, %v371, 0
  %388 = vmatprep.subr.mxu0 %v374
  %389 = vmatpush1.msra.mxu0 %v372
  %390 = vmatprep.subr.mxu0 0.0
  %391 = vmatpush1.msra.mxu0 0.0
  %392 = vmatprep.subr.mxu0 0.0
  %393 = vmatpush1.msra.mxu0 0.0
  %394 = vmatprep.subr.mxu0 0.0
  %395 = vmatpush1.msra.mxu0 0.0
  %396 = vmatprep.subr.mxu0 0.0
  %397 = vmatpush1.msra.mxu0 0.0
  %398 = vmatprep.subr.mxu0 0.0
  %399 = vmatpush1.msra.mxu0 0.0
  %400 = vmatprep.subr.mxu0 0.0
  %401 = vmatpush1.msra.mxu0 0.0
  %402 = vmatprep.subr.mxu0 0.0
  %403 = vmatpush1.msra.mxu0 0.0
  %404 = vmatprep.subr.mxu0 0.0
  %405 = vmatpush1.msra.mxu0 0.0
  %406 = vmatprep.subr.mxu0 0.0
  %407 = vmatpush1.msra.mxu0 0.0
  %408 = vmatprep.subr.mxu0 0.0
  %409 = vmatpush1.msra.mxu0 0.0
  %410 = vmatprep.subr.mxu0 0.0
  %411 = vmatpush1.msra.mxu0 0.0
  %412 = vmatprep.subr.mxu0 0.0
  %413 = vmatpush1.msra.mxu0 0.0
  %414 = vmatprep.subr.mxu0 0.0
  %415 = vmatpush1.msra.mxu0 0.0
  %416 = vmatprep.subr.mxu0 0.0
  %417 = vmatpush1.msra.mxu0 0.0
  %418 = vmatprep.subr.mxu0 0.0
  %419 = vmatpush1.msra.mxu0 0.0
  %420 = vmatprep.subr.mxu0 0.0
  %421 = vmatpush1.msra.mxu0 0.0
  %422 = vmatprep.subr.mxu0 0.0
  %423 = vmatpush1.msra.mxu0 0.0
  %424 = vmatprep.subr.mxu0 0.0
  %425 = vmatpush1.msra.mxu0 0.0
  %426 = vmatprep.subr.mxu0 0.0
  %427 = vmatpush1.msra.mxu0 0.0
  %428 = vmatprep.subr.mxu0 0.0
  %429 = vmatpush1.msra.mxu0 0.0
  %430 = vmatprep.subr.mxu0 0.0
  %431 = vmatpush1.msra.mxu0 0.0
  %432 = vmatprep.subr.mxu0 0.0
  %433 = vmatpush1.msra.mxu0 0.0
  %434 = vmatprep.subr.mxu0 0.0
  %435 = vmatpush1.msra.mxu0 0.0
  %436 = vmatprep.subr.mxu0 0.0
  %437 = vmatpush1.msra.mxu0 0.0
  %438 = vmatprep.subr.mxu0 0.0
  %439 = vmatpush1.msra.mxu0 0.0
  %440 = vmatprep.subr.mxu0 0.0
  %441 = vmatpush1.msra.mxu0 0.0
  %442 = vmatprep.subr.mxu0 0.0
  %443 = vmatpush1.msra.mxu0 0.0
  %444 = vmatprep.subr.mxu0 0.0
  %445 = vmatpush1.msra.mxu0 0.0
  %446 = vmatprep.subr.mxu0 0.0
  %447 = vmatpush1.msra.mxu0 0.0
  %448 = vmatprep.subr.mxu0 0.0
  %449 = vmatpush1.msra.mxu0 0.0
  %450 = vmatprep.subr.mxu0 0.0
  %451 = vmatpush1.msra.mxu0 0.0
  %452 = vmatprep.mubr.f32.mxu0 0.0
  %453 = vmatmul.mubr.f32.gmra.mrb[0].mxu0 %v37
  %v454 = vpop.f32.mrb[0].mxu0
  %v455 = vadd.f32 0.0, %v454
  %v456 = vpop.f32.mrb[0].mxu0
  %v457 = vadd.f32 0.0, %v456
  %458 = vdwg.mxu0
  %459 = vmatprep.subr.mxu0 %v378
  %460 = vmatpush1.msra.mxu0 %v376
  %461 = vmatprep.subr.mxu0 0.0
  %462 = vmatpush1.msra.mxu0 0.0
  %463 = vmatprep.subr.mxu0 0.0
  %464 = vmatpush1.msra.mxu0 0.0
  %465 = vmatprep.subr.mxu0 0.0
  %466 = vmatpush1.msra.mxu0 0.0
  %467 = vmatprep.subr.mxu0 0.0
  %468 = vmatpush1.msra.mxu0 0.0
  %469 = vmatprep.subr.mxu0 0.0
  %470 = vmatpush1.msra.mxu0 0.0
  %471 = vmatprep.subr.mxu0 0.0
  %472 = vmatpush1.msra.mxu0 0.0
  %473 = vmatprep.subr.mxu0 0.0
  %474 = vmatpush1.msra.mxu0 0.0
  %475 = vmatprep.subr.mxu0 0.0
  %476 = vmatpush1.msra.mxu0 0.0
  %477 = vmatprep.subr.mxu0 0.0
  %478 = vmatpush1.msra.mxu0 0.0
  %479 = vmatprep.subr.mxu0 0.0
  %480 = vmatpush1.msra.mxu0 0.0
  %481 = vmatprep.subr.mxu0 0.0
  %482 = vmatpush1.msra.mxu0 0.0
  %483 = vmatprep.subr.mxu0 0.0
  %484 = vmatpush1.msra.mxu0 0.0
  %485 = vmatprep.subr.mxu0 0.0
  %486 = vmatpush1.msra.mxu0 0.0
  %487 = vmatprep.subr.mxu0 0.0
  %488 = vmatpush1.msra.mxu0 0.0
  %489 = vmatprep.subr.mxu0 0.0
  %490 = vmatpush1.msra.mxu0 0.0
  %491 = vmatprep.subr.mxu0 0.0
  %492 = vmatpush1.msra.mxu0 0.0
  %493 = vmatprep.subr.mxu0 0.0
  %494 = vmatpush1.msra.mxu0 0.0
  %495 = vmatprep.subr.mxu0 0.0
  %496 = vmatpush1.msra.mxu0 0.0
  %497 = vmatprep.subr.mxu0 0.0
  %498 = vmatpush1.msra.mxu0 0.0
  %499 = vmatprep.subr.mxu0 0.0
  %500 = vmatpush1.msra.mxu0 0.0
  %501 = vmatprep.subr.mxu0 0.0
  %502 = vmatpush1.msra.mxu0 0.0
  %503 = vmatprep.subr.mxu0 0.0
  %504 = vmatpush1.msra.mxu0 0.0
  %505 = vmatprep.subr.mxu0 0.0
  %506 = vmatpush1.msra.mxu0 0.0
  %507 = vmatprep.subr.mxu0 0.0
  %508 = vmatpush1.msra.mxu0 0.0
  %509 = vmatprep.subr.mxu0 0.0
  %510 = vmatpush1.msra.mxu0 0.0
  %511 = vmatprep.subr.mxu0 0.0
  %512 = vmatpush1.msra.mxu0 0.0
  %513 = vmatprep.subr.mxu0 0.0
  %514 = vmatpush1.msra.mxu0 0.0
  %515 = vmatprep.subr.mxu0 0.0
  %516 = vmatpush1.msra.mxu0 0.0
  %517 = vmatprep.subr.mxu0 0.0
  %518 = vmatpush1.msra.mxu0 0.0
  %519 = vmatprep.subr.mxu0 0.0
  %520 = vmatpush1.msra.mxu0 0.0
  %521 = vmatprep.subr.mxu0 0.0
  %522 = vmatpush1.msra.mxu0 0.0
  %523 = vmatprep.mubr.f32.mxu0 0.0
  %524 = vmatmul.mubr.f32.gmra.mrb[0].mxu0 %v37
  %v525 = vpop.f32.mrb[0].mxu0
  %v526 = vadd.f32 0.0, %v525
  %v527 = vpop.f32.mrb[0].mxu0
  %v528 = vadd.f32 0.0, %v527
  %529 = vdwg.mxu0
  %530 = vmatprep.subr.mxu0 %v382
  %531 = vmatpush1.msra.mxu0 %v380
  %532 = vmatprep.subr.mxu0 0.0
  %533 = vmatpush1.msra.mxu0 0.0
  %534 = vmatprep.subr.mxu0 0.0
  %535 = vmatpush1.msra.mxu0 0.0
  %536 = vmatprep.subr.mxu0 0.0
  %537 = vmatpush1.msra.mxu0 0.0
  %538 = vmatprep.subr.mxu0 0.0
  %539 = vmatpush1.msra.mxu0 0.0
  %540 = vmatprep.subr.mxu0 0.0
  %541 = vmatpush1.msra.mxu0 0.0
  %542 = vmatprep.subr.mxu0 0.0
  %543 = vmatpush1.msra.mxu0 0.0
  %544 = vmatprep.subr.mxu0 0.0
  %545 = vmatpush1.msra.mxu0 0.0
  %546 = vmatprep.subr.mxu0 0.0
  %547 = vmatpush1.msra.mxu0 0.0
  %548 = vmatprep.subr.mxu0 0.0
  %549 = vmatpush1.msra.mxu0 0.0
  %550 = vmatprep.subr.mxu0 0.0
  %551 = vmatpush1.msra.mxu0 0.0
  %552 = vmatprep.subr.mxu0 0.0
  %553 = vmatpush1.msra.mxu0 0.0
  %554 = vmatprep.subr.mxu0 0.0
  %555 = vmatpush1.msra.mxu0 0.0
  %556 = vmatprep.subr.mxu0 0.0
  %557 = vmatpush1.msra.mxu0 0.0
  %558 = vmatprep.subr.mxu0 0.0
  %559 = vmatpush1.msra.mxu0 0.0
  %560 = vmatprep.subr.mxu0 0.0
  %561 = vmatpush1.msra.mxu0 0.0
  %562 = vmatprep.subr.mxu0 0.0
  %563 = vmatpush1.msra.mxu0 0.0
  %564 = vmatprep.subr.mxu0 0.0
  %565 = vmatpush1.msra.mxu0 0.0
  %566 = vmatprep.subr.mxu0 0.0
  %567 = vmatpush1.msra.mxu0 0.0
  %568 = vmatprep.subr.mxu0 0.0
  %569 = vmatpush1.msra.mxu0 0.0
  %570 = vmatprep.subr.mxu0 0.0
  %571 = vmatpush1.msra.mxu0 0.0
  %572 = vmatprep.subr.mxu0 0.0
  %573 = vmatpush1.msra.mxu0 0.0
  %574 = vmatprep.subr.mxu0 0.0
  %575 = vmatpush1.msra.mxu0 0.0
  %576 = vmatprep.subr.mxu0 0.0
  %577 = vmatpush1.msra.mxu0 0.0
  %578 = vmatprep.subr.mxu0 0.0
  %579 = vmatpush1.msra.mxu0 0.0
  %580 = vmatprep.subr.mxu0 0.0
  %581 = vmatpush1.msra.mxu0 0.0
  %582 = vmatprep.subr.mxu0 0.0
  %583 = vmatpush1.msra.mxu0 0.0
  %584 = vmatprep.subr.mxu0 0.0
  %585 = vmatpush1.msra.mxu0 0.0
  %586 = vmatprep.subr.mxu0 0.0
  %587 = vmatpush1.msra.mxu0 0.0
  %588 = vmatprep.subr.mxu0 0.0
  %589 = vmatpush1.msra.mxu0 0.0
  %590 = vmatprep.subr.mxu0 0.0
  %591 = vmatpush1.msra.mxu0 0.0
  %592 = vmatprep.subr.mxu0 0.0
  %593 = vmatpush1.msra.mxu0 0.0
  %594 = vmatprep.mubr.f32.mxu0 0.0
  %595 = vmatmul.mubr.f32.gmra.mrb[0].mxu0 %v37
  %v596 = vpop.f32.mrb[0].mxu0
  %v597 = vadd.f32 0.0, %v596
  %v598 = vpop.f32.mrb[0].mxu0
  %v599 = vadd.f32 0.0, %v598
  %600 = vdwg.mxu0
  %601 = vmatprep.subr.mxu0 %v386
  %602 = vmatpush1.msra.mxu0 %v384
  %603 = vmatprep.subr.mxu0 0.0
  %604 = vmatpush1.msra.mxu0 0.0
  %605 = vmatprep.subr.mxu0 0.0
  %606 = vmatpush1.msra.mxu0 0.0
  %607 = vmatprep.subr.mxu0 0.0
  %608 = vmatpush1.msra.mxu0 0.0
  %609 = vmatprep.subr.mxu0 0.0
  %610 = vmatpush1.msra.mxu0 0.0
  %611 = vmatprep.subr.mxu0 0.0
  %612 = vmatpush1.msra.mxu0 0.0
  %613 = vmatprep.subr.mxu0 0.0
  %614 = vmatpush1.msra.mxu0 0.0
  %615 = vmatprep.subr.mxu0 0.0
  %616 = vmatpush1.msra.mxu0 0.0
  %617 = vmatprep.subr.mxu0 0.0
  %618 = vmatpush1.msra.mxu0 0.0
  %619 = vmatprep.subr.mxu0 0.0
  %620 = vmatpush1.msra.mxu0 0.0
  %621 = vmatprep.subr.mxu0 0.0
  %622 = vmatpush1.msra.mxu0 0.0
  %623 = vmatprep.subr.mxu0 0.0
  %624 = vmatpush1.msra.mxu0 0.0
  %625 = vmatprep.subr.mxu0 0.0
  %626 = vmatpush1.msra.mxu0 0.0
  %627 = vmatprep.subr.mxu0 0.0
  %628 = vmatpush1.msra.mxu0 0.0
  %629 = vmatprep.subr.mxu0 0.0
  %630 = vmatpush1.msra.mxu0 0.0
  %631 = vmatprep.subr.mxu0 0.0
  %632 = vmatpush1.msra.mxu0 0.0
  %633 = vmatprep.subr.mxu0 0.0
  %634 = vmatpush1.msra.mxu0 0.0
  %635 = vmatprep.subr.mxu0 0.0
  %636 = vmatpush1.msra.mxu0 0.0
  %637 = vmatprep.subr.mxu0 0.0
  %638 = vmatpush1.msra.mxu0 0.0
  %639 = vmatprep.subr.mxu0 0.0
  %640 = vmatpush1.msra.mxu0 0.0
  %641 = vmatprep.subr.mxu0 0.0
  %642 = vmatpush1.msra.mxu0 0.0
  %643 = vmatprep.subr.mxu0 0.0
  %644 = vmatpush1.msra.mxu0 0.0
  %645 = vmatprep.subr.mxu0 0.0
  %646 = vmatpush1.msra.mxu0 0.0
  %647 = vmatprep.subr.mxu0 0.0
  %648 = vmatpush1.msra.mxu0 0.0
  %649 = vmatprep.subr.mxu0 0.0
  %650 = vmatpush1.msra.mxu0 0.0
  %651 = vmatprep.subr.mxu0 0.0
  %652 = vmatpush1.msra.mxu0 0.0
  %653 = vmatprep.subr.mxu0 0.0
  %654 = vmatpush1.msra.mxu0 0.0
  %655 = vmatprep.subr.mxu0 0.0
  %656 = vmatpush1.msra.mxu0 0.0
  %657 = vmatprep.subr.mxu0 0.0
  %658 = vmatpush1.msra.mxu0 0.0
  %659 = vmatprep.subr.mxu0 0.0
  %660 = vmatpush1.msra.mxu0 0.0
  %661 = vmatprep.subr.mxu0 0.0
  %662 = vmatpush1.msra.mxu0 0.0
  %663 = vmatprep.subr.mxu0 0.0
  %664 = vmatpush1.msra.mxu0 0.0
  %665 = vmatprep.mubr.f32.mxu0 0.0
  %666 = vmatmul.mubr.f32.gmra.mrb[0].mxu0 %v37
  %v667 = vpop.f32.mrb[0].mxu0
  %v668 = vadd.f32 0.0, %v667
  %v669 = vpop.f32.mrb[0].mxu0
  %v670 = vadd.f32 0.0, %v669
  %671 = vdwg.mxu0
  %v672 = vmax.f32 %v131, %v455
  %v673 = vmax.f32 %v133, %v457
  %v674 = vmax.f32 %v202, %v526
  %v675 = vmax.f32 %v204, %v528
  %v676 = vmax.f32 %v273, %v597
  %v677 = vmax.f32 %v275, %v599
  %v678 = vmax.f32 %v344, %v668
  %v679 = vmax.f32 %v346, %v670
  %v680 = vld [vmem:[%s0 + $0x40] sm:$0xf]
  %v681 = vld [vmem:[%s0 + $0x48] sm:$0xf]
  %v682 = vld [vmem:[%s0 + $0x50] sm:$0xf]
  %v683 = vld [vmem:[%s0 + $0x58] sm:$0xf]
  %v684 = vld [vmem:[%s0 + $0x60] sm:$0xf]
  %v685 = vld [vmem:[%s0 + $0x68] sm:$0xf]
  %v686 = vld [vmem:[%s0 + $0x70] sm:$0xf]
  %v687 = vld [vmem:[%s0 + $0x78] sm:$0xf]
  %v689 = vsel %vm39, %v680, 0
  %v692 = vsel %vm39, %v681, 0
  %v695 = vsel %vm39, %v682, 0
  %v698 = vsel %vm39, %v683, 0
  %v701 = vsel %vm39, %v684, 0
  %v704 = vsel %vm39, %v685, 0
  %v707 = vsel %vm39, %v686, 0
  %v710 = vsel %vm39, %v687, 0
  %712 = vmatprep.subr.mxu0 %v692
  %713 = vmatpush1.msra.mxu0 %v689
  %714 = vmatprep.subr.mxu0 0.0
  %715 = vmatpush1.msra.mxu0 0.0
  %716 = vmatprep.subr.mxu0 0.0
  %717 = vmatpush1.msra.mxu0 0.0
  %718 = vmatprep.subr.mxu0 0.0
  %719 = vmatpush1.msra.mxu0 0.0
  %720 = vmatprep.subr.mxu0 0.0
  %721 = vmatpush1.msra.mxu0 0.0
  %722 = vmatprep.subr.mxu0 0.0
  %723 = vmatpush1.msra.mxu0 0.0
  %724 = vmatprep.subr.mxu0 0.0
  %725 = vmatpush1.msra.mxu0 0.0
  %726 = vmatprep.subr.mxu0 0.0
  %727 = vmatpush1.msra.mxu0 0.0
  %728 = vmatprep.subr.mxu0 0.0
  %729 = vmatpush1.msra.mxu0 0.0
  %730 = vmatprep.subr.mxu0 0.0
  %731 = vmatpush1.msra.mxu0 0.0
  %732 = vmatprep.subr.mxu0 0.0
  %733 = vmatpush1.msra.mxu0 0.0
  %734 = vmatprep.subr.mxu0 0.0
  %735 = vmatpush1.msra.mxu0 0.0
  %736 = vmatprep.subr.mxu0 0.0
  %737 = vmatpush1.msra.mxu0 0.0
  %738 = vmatprep.subr.mxu0 0.0
  %739 = vmatpush1.msra.mxu0 0.0
  %740 = vmatprep.subr.mxu0 0.0
  %741 = vmatpush1.msra.mxu0 0.0
  %742 = vmatprep.subr.mxu0 0.0
  %743 = vmatpush1.msra.mxu0 0.0
  %744 = vmatprep.subr.mxu0 0.0
  %745 = vmatpush1.msra.mxu0 0.0
  %746 = vmatprep.subr.mxu0 0.0
  %747 = vmatpush1.msra.mxu0 0.0
  %748 = vmatprep.subr.mxu0 0.0
  %749 = vmatpush1.msra.mxu0 0.0
  %750 = vmatprep.subr.mxu0 0.0
  %751 = vmatpush1.msra.mxu0 0.0
  %752 = vmatprep.subr.mxu0 0.0
  %753 = vmatpush1.msra.mxu0 0.0
  %754 = vmatprep.subr.mxu0 0.0
  %755 = vmatpush1.msra.mxu0 0.0
  %756 = vmatprep.subr.mxu0 0.0
  %757 = vmatpush1.msra.mxu0 0.0
  %758 = vmatprep.subr.mxu0 0.0
  %759 = vmatpush1.msra.mxu0 0.0
  %760 = vmatprep.subr.mxu0 0.0
  %761 = vmatpush1.msra.mxu0 0.0
  %762 = vmatprep.subr.mxu0 0.0
  %763 = vmatpush1.msra.mxu0 0.0
  %764 = vmatprep.subr.mxu0 0.0
  %765 = vmatpush1.msra.mxu0 0.0
  %766 = vmatprep.subr.mxu0 0.0
  %767 = vmatpush1.msra.mxu0 0.0
  %768 = vmatprep.subr.mxu0 0.0
  %769 = vmatpush1.msra.mxu0 0.0
  %770 = vmatprep.subr.mxu0 0.0
  %771 = vmatpush1.msra.mxu0 0.0
  %772 = vmatprep.subr.mxu0 0.0
  %773 = vmatpush1.msra.mxu0 0.0
  %774 = vmatprep.subr.mxu0 0.0
  %775 = vmatpush1.msra.mxu0 0.0
  %776 = vmatprep.mubr.f32.mxu0 0.0
  %777 = vmatmul.mubr.f32.gmra.mrb[0].mxu0 %v37
  %v778 = vpop.f32.mrb[0].mxu0
  %v779 = vadd.f32 0.0, %v778
  %v780 = vpop.f32.mrb[0].mxu0
  %v781 = vadd.f32 0.0, %v780
  %782 = vdwg.mxu0
  %783 = vmatprep.subr.mxu0 %v698
  %784 = vmatpush1.msra.mxu0 %v695
  %785 = vmatprep.subr.mxu0 0.0
  %786 = vmatpush1.msra.mxu0 0.0
  %787 = vmatprep.subr.mxu0 0.0
  %788 = vmatpush1.msra.mxu0 0.0
  %789 = vmatprep.subr.mxu0 0.0
  %790 = vmatpush1.msra.mxu0 0.0
  %791 = vmatprep.subr.mxu0 0.0
  %792 = vmatpush1.msra.mxu0 0.0
  %793 = vmatprep.subr.mxu0 0.0
  %794 = vmatpush1.msra.mxu0 0.0
  %795 = vmatprep.subr.mxu0 0.0
  %796 = vmatpush1.msra.mxu0 0.0
  %797 = vmatprep.subr.mxu0 0.0
  %798 = vmatpush1.msra.mxu0 0.0
  %799 = vmatprep.subr.mxu0 0.0
  %800 = vmatpush1.msra.mxu0 0.0
  %801 = vmatprep.subr.mxu0 0.0
  %802 = vmatpush1.msra.mxu0 0.0
  %803 = vmatprep.subr.mxu0 0.0
  %804 = vmatpush1.msra.mxu0 0.0
  %805 = vmatprep.subr.mxu0 0.0
  %806 = vmatpush1.msra.mxu0 0.0
  %807 = vmatprep.subr.mxu0 0.0
  %808 = vmatpush1.msra.mxu0 0.0
  %809 = vmatprep.subr.mxu0 0.0
  %810 = vmatpush1.msra.mxu0 0.0
  %811 = vmatprep.subr.mxu0 0.0
  %812 = vmatpush1.msra.mxu0 0.0
  %813 = vmatprep.subr.mxu0 0.0
  %814 = vmatpush1.msra.mxu0 0.0
  %815 = vmatprep.subr.mxu0 0.0
  %816 = vmatpush1.msra.mxu0 0.0
  %817 = vmatprep.subr.mxu0 0.0
  %818 = vmatpush1.msra.mxu0 0.0
  %819 = vmatprep.subr.mxu0 0.0
  %820 = vmatpush1.msra.mxu0 0.0
  %821 = vmatprep.subr.mxu0 0.0
  %822 = vmatpush1.msra.mxu0 0.0
  %823 = vmatprep.subr.mxu0 0.0
  %824 = vmatpush1.msra.mxu0 0.0
  %825 = vmatprep.subr.mxu0 0.0
  %826 = vmatpush1.msra.mxu0 0.0
  %827 = vmatprep.subr.mxu0 0.0
  %828 = vmatpush1.msra.mxu0 0.0
  %829 = vmatprep.subr.mxu0 0.0
  %830 = vmatpush1.msra.mxu0 0.0
  %831 = vmatprep.subr.mxu0 0.0
  %832 = vmatpush1.msra.mxu0 0.0
  %833 = vmatprep.subr.mxu0 0.0
  %834 = vmatpush1.msra.mxu0 0.0
  %835 = vmatprep.subr.mxu0 0.0
  %836 = vmatpush1.msra.mxu0 0.0
  %837 = vmatprep.subr.mxu0 0.0
  %838 = vmatpush1.msra.mxu0 0.0
  %839 = vmatprep.subr.mxu0 0.0
  %840 = vmatpush1.msra.mxu0 0.0
  %841 = vmatprep.subr.mxu0 0.0
  %842 = vmatpush1.msra.mxu0 0.0
  %843 = vmatprep.subr.mxu0 0.0
  %844 = vmatpush1.msra.mxu0 0.0
  %845 = vmatprep.subr.mxu0 0.0
  %846 = vmatpush1.msra.mxu0 0.0
  %847 = vmatprep.mubr.f32.mxu0 0.0
  %848 = vmatmul.mubr.f32.gmra.mrb[0].mxu0 %v37
  %v849 = vpop.f32.mrb[0].mxu0
  %v850 = vadd.f32 0.0, %v849
  %v851 = vpop.f32.mrb[0].mxu0
  %v852 = vadd.f32 0.0, %v851
  %853 = vdwg.mxu0
  %854 = vmatprep.subr.mxu0 %v704
  %855 = vmatpush1.msra.mxu0 %v701
  %856 = vmatprep.subr.mxu0 0.0
  %857 = vmatpush1.msra.mxu0 0.0
  %858 = vmatprep.subr.mxu0 0.0
  %859 = vmatpush1.msra.mxu0 0.0
  %860 = vmatprep.subr.mxu0 0.0
  %861 = vmatpush1.msra.mxu0 0.0
  %862 = vmatprep.subr.mxu0 0.0
  %863 = vmatpush1.msra.mxu0 0.0
  %864 = vmatprep.subr.mxu0 0.0
  %865 = vmatpush1.msra.mxu0 0.0
  %866 = vmatprep.subr.mxu0 0.0
  %867 = vmatpush1.msra.mxu0 0.0
  %868 = vmatprep.subr.mxu0 0.0
  %869 = vmatpush1.msra.mxu0 0.0
  %870 = vmatprep.subr.mxu0 0.0
  %871 = vmatpush1.msra.mxu0 0.0
  %872 = vmatprep.subr.mxu0 0.0
  %873 = vmatpush1.msra.mxu0 0.0
  %874 = vmatprep.subr.mxu0 0.0
  %875 = vmatpush1.msra.mxu0 0.0
  %876 = vmatprep.subr.mxu0 0.0
  %877 = vmatpush1.msra.mxu0 0.0
  %878 = vmatprep.subr.mxu0 0.0
  %879 = vmatpush1.msra.mxu0 0.0
  %880 = vmatprep.subr.mxu0 0.0
  %881 = vmatpush1.msra.mxu0 0.0
  %882 = vmatprep.subr.mxu0 0.0
  %883 = vmatpush1.msra.mxu0 0.0
  %884 = vmatprep.subr.mxu0 0.0
  %885 = vmatpush1.msra.mxu0 0.0
  %886 = vmatprep.subr.mxu0 0.0
  %887 = vmatpush1.msra.mxu0 0.0
  %888 = vmatprep.subr.mxu0 0.0
  %889 = vmatpush1.msra.mxu0 0.0
  %890 = vmatprep.subr.mxu0 0.0
  %891 = vmatpush1.msra.mxu0 0.0
  %892 = vmatprep.subr.mxu0 0.0
  %893 = vmatpush1.msra.mxu0 0.0
  %894 = vmatprep.subr.mxu0 0.0
  %895 = vmatpush1.msra.mxu0 0.0
  %896 = vmatprep.subr.mxu0 0.0
  %897 = vmatpush1.msra.mxu0 0.0
  %898 = vmatprep.subr.mxu0 0.0
  %899 = vmatpush1.msra.mxu0 0.0
  %900 = vmatprep.subr.mxu0 0.0
  %901 = vmatpush1.msra.mxu0 0.0
  %902 = vmatprep.subr.mxu0 0.0
  %903 = vmatpush1.msra.mxu0 0.0
  %904 = vmatprep.subr.mxu0 0.0
  %905 = vmatpush1.msra.mxu0 0.0
  %906 = vmatprep.subr.mxu0 0.0
  %907 = vmatpush1.msra.mxu0 0.0
  %908 = vmatprep.subr.mxu0 0.0
  %909 = vmatpush1.msra.mxu0 0.0
  %910 = vmatprep.subr.mxu0 0.0
  %911 = vmatpush1.msra.mxu0 0.0
  %912 = vmatprep.subr.mxu0 0.0
  %913 = vmatpush1.msra.mxu0 0.0
  %914 = vmatprep.subr.mxu0 0.0
  %915 = vmatpush1.msra.mxu0 0.0
  %916 = vmatprep.subr.mxu0 0.0
  %917 = vmatpush1.msra.mxu0 0.0
  %918 = vmatprep.mubr.f32.mxu0 0.0
  %919 = vmatmul.mubr.f32.gmra.mrb[0].mxu0 %v37
  %v920 = vpop.f32.mrb[0].mxu0
  %v921 = vadd.f32 0.0, %v920
  %v922 = vpop.f32.mrb[0].mxu0
  %v923 = vadd.f32 0.0, %v922
  %924 = vdwg.mxu0
  %925 = vmatprep.subr.mxu0 %v710
  %926 = vmatpush1.msra.mxu0 %v707
  %927 = vmatprep.subr.mxu0 0.0
  %928 = vmatpush1.msra.mxu0 0.0
  %929 = vmatprep.subr.mxu0 0.0
  %930 = vmatpush1.msra.mxu0 0.0
  %931 = vmatprep.subr.mxu0 0.0
  %932 = vmatpush1.msra.mxu0 0.0
  %933 = vmatprep.subr.mxu0 0.0
  %934 = vmatpush1.msra.mxu0 0.0
  %935 = vmatprep.subr.mxu0 0.0
  %936 = vmatpush1.msra.mxu0 0.0
  %937 = vmatprep.subr.mxu0 0.0
  %938 = vmatpush1.msra.mxu0 0.0
  %939 = vmatprep.subr.mxu0 0.0
  %940 = vmatpush1.msra.mxu0 0.0
  %941 = vmatprep.subr.mxu0 0.0
  %942 = vmatpush1.msra.mxu0 0.0
  %943 = vmatprep.subr.mxu0 0.0
  %944 = vmatpush1.msra.mxu0 0.0
  %945 = vmatprep.subr.mxu0 0.0
  %946 = vmatpush1.msra.mxu0 0.0
  %947 = vmatprep.subr.mxu0 0.0
  %948 = vmatpush1.msra.mxu0 0.0
  %949 = vmatprep.subr.mxu0 0.0
  %950 = vmatpush1.msra.mxu0 0.0
  %951 = vmatprep.subr.mxu0 0.0
  %952 = vmatpush1.msra.mxu0 0.0
  %953 = vmatprep.subr.mxu0 0.0
  %954 = vmatpush1.msra.mxu0 0.0
  %955 = vmatprep.subr.mxu0 0.0
  %956 = vmatpush1.msra.mxu0 0.0
  %957 = vmatprep.subr.mxu0 0.0
  %958 = vmatpush1.msra.mxu0 0.0
  %959 = vmatprep.subr.mxu0 0.0
  %960 = vmatpush1.msra.mxu0 0.0
  %961 = vmatprep.subr.mxu0 0.0
  %962 = vmatpush1.msra.mxu0 0.0
  %963 = vmatprep.subr.mxu0 0.0
  %964 = vmatpush1.msra.mxu0 0.0
  %965 = vmatprep.subr.mxu0 0.0
  %966 = vmatpush1.msra.mxu0 0.0
  %967 = vmatprep.subr.mxu0 0.0
  %968 = vmatpush1.msra.mxu0 0.0
  %969 = vmatprep.subr.mxu0 0.0
  %970 = vmatpush1.msra.mxu0 0.0
  %971 = vmatprep.subr.mxu0 0.0
  %972 = vmatpush1.msra.mxu0 0.0
  %973 = vmatprep.subr.mxu0 0.0
  %974 = vmatpush1.msra.mxu0 0.0
  %975 = vmatprep.subr.mxu0 0.0
  %976 = vmatpush1.msra.mxu0 0.0
  %977 = vmatprep.subr.mxu0 0.0
  %978 = vmatpush1.msra.mxu0 0.0
  %979 = vmatprep.subr.mxu0 0.0
  %980 = vmatpush1.msra.mxu0 0.0
  %981 = vmatprep.subr.mxu0 0.0
  %982 = vmatpush1.msra.mxu0 0.0
  %983 = vmatprep.subr.mxu0 0.0
  %984 = vmatpush1.msra.mxu0 0.0
  %985 = vmatprep.subr.mxu0 0.0
  %986 = vmatpush1.msra.mxu0 0.0
  %987 = vmatprep.subr.mxu0 0.0
  %988 = vmatpush1.msra.mxu0 0.0
  %989 = vmatprep.mubr.f32.mxu0 0.0
  %990 = vmatmul.mubr.f32.gmra.mrb[0].mxu0 %v37
  %v991 = vpop.f32.mrb[0].mxu0
  %v992 = vadd.f32 0.0, %v991
  %v993 = vpop.f32.mrb[0].mxu0
  %v994 = vadd.f32 0.0, %v993
  %995 = vdwg.mxu0
  %v996 = vmax.f32 %v672, %v779
  %v997 = vmax.f32 %v673, %v781
  %v998 = vmax.f32 %v674, %v850
  %v999 = vmax.f32 %v675, %v852
  %v1000 = vmax.f32 %v676, %v921
  %v1001 = vmax.f32 %v677, %v923
  %v1002 = vmax.f32 %v678, %v992
  %v1003 = vmax.f32 %v679, %v994
  %v1004 = vld [vmem:[%s0 + $0x40] sm:$0xf0]
  %v1005 = vld [vmem:[%s0 + $0x48] sm:$0xf0]
  %v1006 = vld [vmem:[%s0 + $0x50] sm:$0xf0]
  %v1007 = vld [vmem:[%s0 + $0x58] sm:$0xf0]
  %v1008 = vld [vmem:[%s0 + $0x60] sm:$0xf0]
  %v1009 = vld [vmem:[%s0 + $0x68] sm:$0xf0]
  %v1010 = vld [vmem:[%s0 + $0x70] sm:$0xf0]
  %v1011 = vld [vmem:[%s0 + $0x78] sm:$0xf0]
  %v1020 = vrot.slane %v1004, 4
  %v1021 = vrot.slane %v1005, 4
  %v1022 = vrot.slane %v1006, 4
  %v1023 = vrot.slane %v1007, 4
  %v1024 = vrot.slane %v1008, 4
  %v1025 = vrot.slane %v1009, 4
  %v1026 = vrot.slane %v1010, 4
  %v1027 = vrot.slane %v1011, 4
  %v1028 = vsel %vm39, %v1020, 0
  %v1030 = vsel %vm39, %v1021, 0
  %v1032 = vsel %vm39, %v1022, 0
  %v1034 = vsel %vm39, %v1023, 0
  %v1036 = vsel %vm39, %v1024, 0
  %v1038 = vsel %vm39, %v1025, 0
  %v1040 = vsel %vm39, %v1026, 0
  %v1042 = vsel %vm39, %v1027, 0
  %1044 = vmatprep.subr.mxu0 %v1030
  %1045 = vmatpush1.msra.mxu0 %v1028
  %1046 = vmatprep.subr.mxu0 0.0
  %1047 = vmatpush1.msra.mxu0 0.0
  %1048 = vmatprep.subr.mxu0 0.0
  %1049 = vmatpush1.msra.mxu0 0.0
  %1050 = vmatprep.subr.mxu0 0.0
  %1051 = vmatpush1.msra.mxu0 0.0
  %1052 = vmatprep.subr.mxu0 0.0
  %1053 = vmatpush1.msra.mxu0 0.0
  %1054 = vmatprep.subr.mxu0 0.0
  %1055 = vmatpush1.msra.mxu0 0.0
  %1056 = vmatprep.subr.mxu0 0.0
  %1057 = vmatpush1.msra.mxu0 0.0
  %1058 = vmatprep.subr.mxu0 0.0
  %1059 = vmatpush1.msra.mxu0 0.0
  %1060 = vmatprep.subr.mxu0 0.0
  %1061 = vmatpush1.msra.mxu0 0.0
  %1062 = vmatprep.subr.mxu0 0.0
  %1063 = vmatpush1.msra.mxu0 0.0
  %1064 = vmatprep.subr.mxu0 0.0
  %1065 = vmatpush1.msra.mxu0 0.0
  %1066 = vmatprep.subr.mxu0 0.0
  %1067 = vmatpush1.msra.mxu0 0.0
  %1068 = vmatprep.subr.mxu0 0.0
  %1069 = vmatpush1.msra.mxu0 0.0
  %1070 = vmatprep.subr.mxu0 0.0
  %1071 = vmatpush1.msra.mxu0 0.0
  %1072 = vmatprep.subr.mxu0 0.0
  %1073 = vmatpush1.msra.mxu0 0.0
  %1074 = vmatprep.subr.mxu0 0.0
  %1075 = vmatpush1.msra.mxu0 0.0
  %1076 = vmatprep.subr.mxu0 0.0
  %1077 = vmatpush1.msra.mxu0 0.0
  %1078 = vmatprep.subr.mxu0 0.0
  %1079 = vmatpush1.msra.mxu0 0.0
  %1080 = vmatprep.subr.mxu0 0.0
  %1081 = vmatpush1.msra.mxu0 0.0
  %1082 = vmatprep.subr.mxu0 0.0
  %1083 = vmatpush1.msra.mxu0 0.0
  %1084 = vmatprep.subr.mxu0 0.0
  %1085 = vmatpush1.msra.mxu0 0.0
  %1086 = vmatprep.subr.mxu0 0.0
  %1087 = vmatpush1.msra.mxu0 0.0
  %1088 = vmatprep.subr.mxu0 0.0
  %1089 = vmatpush1.msra.mxu0 0.0
  %1090 = vmatprep.subr.mxu0 0.0
  %1091 = vmatpush1.msra.mxu0 0.0
  %1092 = vmatprep.subr.mxu0 0.0
  %1093 = vmatpush1.msra.mxu0 0.0
  %1094 = vmatprep.subr.mxu0 0.0
  %1095 = vmatpush1.msra.mxu0 0.0
  %1096 = vmatprep.subr.mxu0 0.0
  %1097 = vmatpush1.msra.mxu0 0.0
  %1098 = vmatprep.subr.mxu0 0.0
  %1099 = vmatpush1.msra.mxu0 0.0
  %1100 = vmatprep.subr.mxu0 0.0
  %1101 = vmatpush1.msra.mxu0 0.0
  %1102 = vmatprep.subr.mxu0 0.0
  %1103 = vmatpush1.msra.mxu0 0.0
  %1104 = vmatprep.subr.mxu0 0.0
  %1105 = vmatpush1.msra.mxu0 0.0
  %1106 = vmatprep.subr.mxu0 0.0
  %1107 = vmatpush1.msra.mxu0 0.0
  %1108 = vmatprep.mubr.f32.mxu0 0.0
  %1109 = vmatmul.mubr.f32.gmra.mrb[0].mxu0 %v37
  %v1110 = vpop.f32.mrb[0].mxu0
  %v1111 = vadd.f32 0.0, %v1110
  %v1112 = vpop.f32.mrb[0].mxu0
  %v1113 = vadd.f32 0.0, %v1112
  %1114 = vdwg.mxu0
  %1115 = vmatprep.subr.mxu0 %v1034
  %1116 = vmatpush1.msra.mxu0 %v1032
  %1117 = vmatprep.subr.mxu0 0.0
  %1118 = vmatpush1.msra.mxu0 0.0
  %1119 = vmatprep.subr.mxu0 0.0
  %1120 = vmatpush1.msra.mxu0 0.0
  %1121 = vmatprep.subr.mxu0 0.0
  %1122 = vmatpush1.msra.mxu0 0.0
  %1123 = vmatprep.subr.mxu0 0.0
  %1124 = vmatpush1.msra.mxu0 0.0
  %1125 = vmatprep.subr.mxu0 0.0
  %1126 = vmatpush1.msra.mxu0 0.0
  %1127 = vmatprep.subr.mxu0 0.0
  %1128 = vmatpush1.msra.mxu0 0.0
  %1129 = vmatprep.subr.mxu0 0.0
  %1130 = vmatpush1.msra.mxu0 0.0
  %1131 = vmatprep.subr.mxu0 0.0
  %1132 = vmatpush1.msra.mxu0 0.0
  %1133 = vmatprep.subr.mxu0 0.0
  %1134 = vmatpush1.msra.mxu0 0.0
  %1135 = vmatprep.subr.mxu0 0.0
  %1136 = vmatpush1.msra.mxu0 0.0
  %1137 = vmatprep.subr.mxu0 0.0
  %1138 = vmatpush1.msra.mxu0 0.0
  %1139 = vmatprep.subr.mxu0 0.0
  %1140 = vmatpush1.msra.mxu0 0.0
  %1141 = vmatprep.subr.mxu0 0.0
  %1142 = vmatpush1.msra.mxu0 0.0
  %1143 = vmatprep.subr.mxu0 0.0
  %1144 = vmatpush1.msra.mxu0 0.0
  %1145 = vmatprep.subr.mxu0 0.0
  %1146 = vmatpush1.msra.mxu0 0.0
  %1147 = vmatprep.subr.mxu0 0.0
  %1148 = vmatpush1.msra.mxu0 0.0
  %1149 = vmatprep.subr.mxu0 0.0
  %1150 = vmatpush1.msra.mxu0 0.0
  %1151 = vmatprep.subr.mxu0 0.0
  %1152 = vmatpush1.msra.mxu0 0.0
  %1153 = vmatprep.subr.mxu0 0.0
  %1154 = vmatpush1.msra.mxu0 0.0
  %1155 = vmatprep.subr.mxu0 0.0
  %1156 = vmatpush1.msra.mxu0 0.0
  %1157 = vmatprep.subr.mxu0 0.0
  %1158 = vmatpush1.msra.mxu0 0.0
  %1159 = vmatprep.subr.mxu0 0.0
  %1160 = vmatpush1.msra.mxu0 0.0
  %1161 = vmatprep.subr.mxu0 0.0
  %1162 = vmatpush1.msra.mxu0 0.0
  %1163 = vmatprep.subr.mxu0 0.0
  %1164 = vmatpush1.msra.mxu0 0.0
  %1165 = vmatprep.subr.mxu0 0.0
  %1166 = vmatpush1.msra.mxu0 0.0
  %1167 = vmatprep.subr.mxu0 0.0
  %1168 = vmatpush1.msra.mxu0 0.0
  %1169 = vmatprep.subr.mxu0 0.0
  %1170 = vmatpush1.msra.mxu0 0.0
  %1171 = vmatprep.subr.mxu0 0.0
  %1172 = vmatpush1.msra.mxu0 0.0
  %1173 = vmatprep.subr.mxu0 0.0
  %1174 = vmatpush1.msra.mxu0 0.0
  %1175 = vmatprep.subr.mxu0 0.0
  %1176 = vmatpush1.msra.mxu0 0.0
  %1177 = vmatprep.subr.mxu0 0.0
  %1178 = vmatpush1.msra.mxu0 0.0
  %1179 = vmatprep.mubr.f32.mxu0 0.0
  %1180 = vmatmul.mubr.f32.gmra.mrb[0].mxu0 %v37
  %v1181 = vpop.f32.mrb[0].mxu0
  %v1182 = vadd.f32 0.0, %v1181
  %v1183 = vpop.f32.mrb[0].mxu0
  %v1184 = vadd.f32 0.0, %v1183
  %1185 = vdwg.mxu0
  %1186 = vmatprep.subr.mxu0 %v1038
  %1187 = vmatpush1.msra.mxu0 %v1036
  %1188 = vmatprep.subr.mxu0 0.0
  %1189 = vmatpush1.msra.mxu0 0.0
  %1190 = vmatprep.subr.mxu0 0.0
  %1191 = vmatpush1.msra.mxu0 0.0
  %1192 = vmatprep.subr.mxu0 0.0
  %1193 = vmatpush1.msra.mxu0 0.0
  %1194 = vmatprep.subr.mxu0 0.0
  %1195 = vmatpush1.msra.mxu0 0.0
  %1196 = vmatprep.subr.mxu0 0.0
  %1197 = vmatpush1.msra.mxu0 0.0
  %1198 = vmatprep.subr.mxu0 0.0
  %1199 = vmatpush1.msra.mxu0 0.0
  %1200 = vmatprep.subr.mxu0 0.0
  %1201 = vmatpush1.msra.mxu0 0.0
  %1202 = vmatprep.subr.mxu0 0.0
  %1203 = vmatpush1.msra.mxu0 0.0
  %1204 = vmatprep.subr.mxu0 0.0
  %1205 = vmatpush1.msra.mxu0 0.0
  %1206 = vmatprep.subr.mxu0 0.0
  %1207 = vmatpush1.msra.mxu0 0.0
  %1208 = vmatprep.subr.mxu0 0.0
  %1209 = vmatpush1.msra.mxu0 0.0
  %1210 = vmatprep.subr.mxu0 0.0
  %1211 = vmatpush1.msra.mxu0 0.0
  %1212 = vmatprep.subr.mxu0 0.0
  %1213 = vmatpush1.msra.mxu0 0.0
  %1214 = vmatprep.subr.mxu0 0.0
  %1215 = vmatpush1.msra.mxu0 0.0
  %1216 = vmatprep.subr.mxu0 0.0
  %1217 = vmatpush1.msra.mxu0 0.0
  %1218 = vmatprep.subr.mxu0 0.0
  %1219 = vmatpush1.msra.mxu0 0.0
  %1220 = vmatprep.subr.mxu0 0.0
  %1221 = vmatpush1.msra.mxu0 0.0
  %1222 = vmatprep.subr.mxu0 0.0
  %1223 = vmatpush1.msra.mxu0 0.0
  %1224 = vmatprep.subr.mxu0 0.0
  %1225 = vmatpush1.msra.mxu0 0.0
  %1226 = vmatprep.subr.mxu0 0.0
  %1227 = vmatpush1.msra.mxu0 0.0
  %1228 = vmatprep.subr.mxu0 0.0
  %1229 = vmatpush1.msra.mxu0 0.0
  %1230 = vmatprep.subr.mxu0 0.0
  %1231 = vmatpush1.msra.mxu0 0.0
  %1232 = vmatprep.subr.mxu0 0.0
  %1233 = vmatpush1.msra.mxu0 0.0
  %1234 = vmatprep.subr.mxu0 0.0
  %1235 = vmatpush1.msra.mxu0 0.0
  %1236 = vmatprep.subr.mxu0 0.0
  %1237 = vmatpush1.msra.mxu0 0.0
  %1238 = vmatprep.subr.mxu0 0.0
  %1239 = vmatpush1.msra.mxu0 0.0
  %1240 = vmatprep.subr.mxu0 0.0
  %1241 = vmatpush1.msra.mxu0 0.0
  %1242 = vmatprep.subr.mxu0 0.0
  %1243 = vmatpush1.msra.mxu0 0.0
  %1244 = vmatprep.subr.mxu0 0.0
  %1245 = vmatpush1.msra.mxu0 0.0
  %1246 = vmatprep.subr.mxu0 0.0
  %1247 = vmatpush1.msra.mxu0 0.0
  %1248 = vmatprep.subr.mxu0 0.0
  %1249 = vmatpush1.msra.mxu0 0.0
  %1250 = vmatprep.mubr.f32.mxu0 0.0
  %1251 = vmatmul.mubr.f32.gmra.mrb[0].mxu0 %v37
  %v1252 = vpop.f32.mrb[0].mxu0
  %v1253 = vadd.f32 0.0, %v1252
  %v1254 = vpop.f32.mrb[0].mxu0
  %v1255 = vadd.f32 0.0, %v1254
  %1256 = vdwg.mxu0
  %1257 = vmatprep.subr.mxu0 %v1042
  %1258 = vmatpush1.msra.mxu0 %v1040
  %1259 = vmatprep.subr.mxu0 0.0
  %1260 = vmatpush1.msra.mxu0 0.0
  %1261 = vmatprep.subr.mxu0 0.0
  %1262 = vmatpush1.msra.mxu0 0.0
  %1263 = vmatprep.subr.mxu0 0.0
  %1264 = vmatpush1.msra.mxu0 0.0
  %1265 = vmatprep.subr.mxu0 0.0
  %1266 = vmatpush1.msra.mxu0 0.0
  %1267 = vmatprep.subr.mxu0 0.0
  %1268 = vmatpush1.msra.mxu0 0.0
  %1269 = vmatprep.subr.mxu0 0.0
  %1270 = vmatpush1.msra.mxu0 0.0
  %1271 = vmatprep.subr.mxu0 0.0
  %1272 = vmatpush1.msra.mxu0 0.0
  %1273 = vmatprep.subr.mxu0 0.0
  %1274 = vmatpush1.msra.mxu0 0.0
  %1275 = vmatprep.subr.mxu0 0.0
  %1276 = vmatpush1.msra.mxu0 0.0
  %1277 = vmatprep.subr.mxu0 0.0
  %1278 = vmatpush1.msra.mxu0 0.0
  %1279 = vmatprep.subr.mxu0 0.0
  %1280 = vmatpush1.msra.mxu0 0.0
  %1281 = vmatprep.subr.mxu0 0.0
  %1282 = vmatpush1.msra.mxu0 0.0
  %1283 = vmatprep.subr.mxu0 0.0
  %1284 = vmatpush1.msra.mxu0 0.0
  %1285 = vmatprep.subr.mxu0 0.0
  %1286 = vmatpush1.msra.mxu0 0.0
  %1287 = vmatprep.subr.mxu0 0.0
  %1288 = vmatpush1.msra.mxu0 0.0
  %1289 = vmatprep.subr.mxu0 0.0
  %1290 = vmatpush1.msra.mxu0 0.0
  %1291 = vmatprep.subr.mxu0 0.0
  %1292 = vmatpush1.msra.mxu0 0.0
  %1293 = vmatprep.subr.mxu0 0.0
  %1294 = vmatpush1.msra.mxu0 0.0
  %1295 = vmatprep.subr.mxu0 0.0
  %1296 = vmatpush1.msra.mxu0 0.0
  %1297 = vmatprep.subr.mxu0 0.0
  %1298 = vmatpush1.msra.mxu0 0.0
  %1299 = vmatprep.subr.mxu0 0.0
  %1300 = vmatpush1.msra.mxu0 0.0
  %1301 = vmatprep.subr.mxu0 0.0
  %1302 = vmatpush1.msra.mxu0 0.0
  %1303 = vmatprep.subr.mxu0 0.0
  %1304 = vmatpush1.msra.mxu0 0.0
  %1305 = vmatprep.subr.mxu0 0.0
  %1306 = vmatpush1.msra.mxu0 0.0
  %1307 = vmatprep.subr.mxu0 0.0
  %1308 = vmatpush1.msra.mxu0 0.0
  %1309 = vmatprep.subr.mxu0 0.0
  %1310 = vmatpush1.msra.mxu0 0.0
  %1311 = vmatprep.subr.mxu0 0.0
  %1312 = vmatpush1.msra.mxu0 0.0
  %1313 = vmatprep.subr.mxu0 0.0
  %1314 = vmatpush1.msra.mxu0 0.0
  %1315 = vmatprep.subr.mxu0 0.0
  %1316 = vmatpush1.msra.mxu0 0.0
  %1317 = vmatprep.subr.mxu0 0.0
  %1318 = vmatpush1.msra.mxu0 0.0
  %1319 = vmatprep.subr.mxu0 0.0
  %1320 = vmatpush1.msra.mxu0 0.0
  %1321 = vmatprep.mubr.f32.mxu0 0.0
  %1322 = vmatmul.mubr.f32.gmra.mrb[0].mxu0 %v37
  %v1323 = vpop.f32.mrb[0].mxu0
  %v1324 = vadd.f32 0.0, %v1323
  %v1325 = vpop.f32.mrb[0].mxu0
  %v1326 = vadd.f32 0.0, %v1325
  %1327 = vdwg.mxu0
  %v1328 = vmax.f32 %v996, %v1111
  %v1329 = vmax.f32 %v997, %v1113
  %v1330 = vmax.f32 %v998, %v1182
  %v1331 = vmax.f32 %v999, %v1184
  %v1332 = vmax.f32 %v1000, %v1253
  %v1333 = vmax.f32 %v1001, %v1255
  %v1334 = vmax.f32 %v1002, %v1324
  %v1335 = vmax.f32 %v1003, %v1326
  %v1336 = vld [vmem:[%s3] sm:$0xff]
  %1338 = vset.pattern.permute.xlu0 0
  %1339 = vperm.xlu0 %1338, %v1336
  %v1340 = vpop.permute.xlu0 %1339
  %v1342 = vadd.f32 %v1328, %v1340
  %v1343 = vadd.f32 %v1329, %v1340
  %v1344 = vadd.f32 %v1330, %v1340
  %v1345 = vadd.f32 %v1331, %v1340
  %v1346 = vadd.f32 %v1332, %v1340
  %v1347 = vadd.f32 %v1333, %v1340
  %v1348 = vadd.f32 %v1334, %v1340
  %v1349 = vadd.f32 %v1335, %v1340
  %v1350 = vmax.f32 %v1342, 0.0
  %v1351 = vmax.f32 %v1343, 0.0
  %v1352 = vmax.f32 %v1344, 0.0
  %v1353 = vmax.f32 %v1345, 0.0
  %v1354 = vmax.f32 %v1346, 0.0
  %v1355 = vmax.f32 %v1347, 0.0
  %v1356 = vmax.f32 %v1348, 0.0
  %v1357 = vmax.f32 %v1349, 0.0
  %v1358 = vld [vmem:[%s1] sm:$0xff]
  %v1360 = vlaneseq
  %v1361 = vshrl.u32 %v1360, 7
  %v1362 = vsub.s32 0, %v1361
  %v1363 = vrot.slane %v1358, %v1362
  %v1364 = vlaneseq
  %v1365 = vshrl.u32 %v1364, 7
  %v1366 = vsub.s32 1, %v1365
  %v1367 = vrot.slane %v1358, %v1366
  %v1368 = vlaneseq
  %v1369 = vshrl.u32 %v1368, 7
  %v1370 = vsub.s32 2, %v1369
  %v1371 = vrot.slane %v1358, %v1370
  %v1372 = vlaneseq
  %v1373 = vshrl.u32 %v1372, 7
  %v1374 = vsub.s32 3, %v1373
  %v1375 = vrot.slane %v1358, %v1374
  %v1376 = vlaneseq
  %v1377 = vshrl.u32 %v1376, 7
  %v1378 = vsub.s32 4, %v1377
  %v1379 = vrot.slane %v1358, %v1378
  %v1380 = vlaneseq
  %v1381 = vshrl.u32 %v1380, 7
  %v1382 = vsub.s32 5, %v1381
  %v1383 = vrot.slane %v1358, %v1382
  %v1384 = vlaneseq
  %v1385 = vshrl.u32 %v1384, 7
  %v1386 = vsub.s32 6, %v1385
  %v1387 = vrot.slane %v1358, %v1386
  %v1388 = vlaneseq
  %v1389 = vshrl.u32 %v1388, 7
  %v1390 = vsub.s32 7, %v1389
  %v1391 = vrot.slane %v1358, %v1390
  %v1400 = vmul.f32 %v1350, %v1363
  %v1401 = vmul.f32 %v1351, %v1367
  %v1402 = vmul.f32 %v1352, %v1371
  %v1403 = vmul.f32 %v1353, %v1375
  %v1404 = vmul.f32 %v1354, %v1379
  %v1405 = vmul.f32 %v1355, %v1383
  %v1406 = vmul.f32 %v1356, %v1387
  %v1407 = vmul.f32 %v1357, %v1391
  %1408 = vrot.lane.b32.xlu0 %v1400, 1
  %v1409 = vpop.permute.xlu0 %1408
  %1410 = vrot.lane.b32.xlu0 %v1401, 1
  %v1411 = vpop.permute.xlu0 %1410
  %1412 = vrot.lane.b32.xlu0 %v1402, 1
  %v1413 = vpop.permute.xlu0 %1412
  %1414 = vrot.lane.b32.xlu0 %v1403, 1
  %v1415 = vpop.permute.xlu0 %1414
  %1416 = vrot.lane.b32.xlu0 %v1404, 1
  %v1417 = vpop.permute.xlu0 %1416
  %1418 = vrot.lane.b32.xlu0 %v1405, 1
  %v1419 = vpop.permute.xlu0 %1418
  %1420 = vrot.lane.b32.xlu0 %v1406, 1
  %v1421 = vpop.permute.xlu0 %1420
  %1422 = vrot.lane.b32.xlu0 %v1407, 1
  %v1423 = vpop.permute.xlu0 %1422
  %v1424 = vlaneseq
  %v1425 = vand.u32 %v1424, 127
  %vm1426 = vcmp.lt.s32.totalorder %v1425, 1
  %v1427 = vsel %vm1426, %v1421, %v1423
  %v1428 = vsel %vm1426, %v1419, %v1421
  %v1429 = vsel %vm1426, %v1417, %v1419
  %v1430 = vsel %vm1426, %v1415, %v1417
  %v1431 = vsel %vm1426, %v1413, %v1415
  %v1432 = vsel %vm1426, %v1411, %v1413
  %v1433 = vsel %vm1426, %v1409, %v1411
  %v1434 = vsel %vm1426, %v1423, %v1409
  %v1435 = vld [vmem:[%s4] sm:$0xff]
  %v1436 = vld [vmem:[%s4 + $0x8] sm:$0xff]
  %v1437 = vld [vmem:[%s5] sm:$0xff]
  %v1438 = vld [vmem:[%s5 + $0x8] sm:$0xff]
  %vm1439 = vcmask 64512
  %v1441 = vsel %vm1439, %v1437, 0
  %v1444 = vsel %vm1439, %v1438, 0
  %1446 = vmatprep.subr.mxu0 %v1401
  %1447 = vmatpush1.msra.mxu0 %v1400
  %1448 = vmatprep.subr.mxu0 0.0
  %1449 = vmatpush1.msra.mxu0 0.0
  %1450 = vmatprep.subr.mxu0 0.0
  %1451 = vmatpush1.msra.mxu0 0.0
  %1452 = vmatprep.subr.mxu0 0.0
  %1453 = vmatpush1.msra.mxu0 0.0
  %1454 = vmatprep.subr.mxu0 0.0
  %1455 = vmatpush1.msra.mxu0 0.0
  %1456 = vmatprep.subr.mxu0 0.0
  %1457 = vmatpush1.msra.mxu0 0.0
  %1458 = vmatprep.subr.mxu0 0.0
  %1459 = vmatpush1.msra.mxu0 0.0
  %1460 = vmatprep.subr.mxu0 0.0
  %1461 = vmatpush1.msra.mxu0 0.0
  %1462 = vmatprep.subr.mxu0 0.0
  %1463 = vmatpush1.msra.mxu0 0.0
  %1464 = vmatprep.subr.mxu0 0.0
  %1465 = vmatpush1.msra.mxu0 0.0
  %1466 = vmatprep.subr.mxu0 0.0
  %1467 = vmatpush1.msra.mxu0 0.0
  %1468 = vmatprep.subr.mxu0 0.0
  %1469 = vmatpush1.msra.mxu0 0.0
  %1470 = vmatprep.subr.mxu0 0.0
  %1471 = vmatpush1.msra.mxu0 0.0
  %1472 = vmatprep.subr.mxu0 0.0
  %1473 = vmatpush1.msra.mxu0 0.0
  %1474 = vmatprep.subr.mxu0 0.0
  %1475 = vmatpush1.msra.mxu0 0.0
  %1476 = vmatprep.subr.mxu0 0.0
  %1477 = vmatpush1.msra.mxu0 0.0
  %1478 = vmatprep.subr.mxu0 0.0
  %1479 = vmatpush1.msra.mxu0 0.0
  %1480 = vmatprep.subr.mxu0 0.0
  %1481 = vmatpush1.msra.mxu0 0.0
  %1482 = vmatprep.subr.mxu0 0.0
  %1483 = vmatpush1.msra.mxu0 0.0
  %1484 = vmatprep.subr.mxu0 0.0
  %1485 = vmatpush1.msra.mxu0 0.0
  %1486 = vmatprep.subr.mxu0 0.0
  %1487 = vmatpush1.msra.mxu0 0.0
  %1488 = vmatprep.subr.mxu0 0.0
  %1489 = vmatpush1.msra.mxu0 0.0
  %1490 = vmatprep.subr.mxu0 0.0
  %1491 = vmatpush1.msra.mxu0 0.0
  %1492 = vmatprep.subr.mxu0 0.0
  %1493 = vmatpush1.msra.mxu0 0.0
  %1494 = vmatprep.subr.mxu0 0.0
  %1495 = vmatpush1.msra.mxu0 0.0
  %1496 = vmatprep.subr.mxu0 0.0
  %1497 = vmatpush1.msra.mxu0 0.0
  %1498 = vmatprep.subr.mxu0 0.0
  %1499 = vmatpush1.msra.mxu0 0.0
  %1500 = vmatprep.subr.mxu0 0.0
  %1501 = vmatpush1.msra.mxu0 0.0
  %1502 = vmatprep.subr.mxu0 0.0
  %1503 = vmatpush1.msra.mxu0 0.0
  %1504 = vmatprep.subr.mxu0 0.0
  %1505 = vmatpush1.msra.mxu0 0.0
  %1506 = vmatprep.subr.mxu0 0.0
  %1507 = vmatpush1.msra.mxu0 0.0
  %1508 = vmatprep.subr.mxu0 0.0
  %1509 = vmatpush1.msra.mxu0 0.0
  %1510 = vmatprep.mubr.f32.mxu0 0.0
  %1511 = vmatmul.mubr.f32.gmra.mrb[0].mxu0 %v1441
  %v1512 = vpop.f32.mrb[0].mxu0
  %v1513 = vadd.f32 0.0, %v1512
  %v1514 = vpop.f32.mrb[0].mxu0
  %v1515 = vadd.f32 0.0, %v1514
  %1516 = vmatprep.mubr.f32.mxu0 0.0
  %1517 = vmatmul.mubr.f32.gmra.mrb[0].mxu0 %v1444
  %v1518 = vpop.f32.mrb[0].mxu0
  %v1519 = vadd.f32 0.0, %v1518
  %v1520 = vpop.f32.mrb[0].mxu0
  %v1521 = vadd.f32 0.0, %v1520
  %1522 = vdwg.mxu0
  %1523 = vmatprep.subr.mxu0 %v1403
  %1524 = vmatpush1.msra.mxu0 %v1402
  %1525 = vmatprep.subr.mxu0 0.0
  %1526 = vmatpush1.msra.mxu0 0.0
  %1527 = vmatprep.subr.mxu0 0.0
  %1528 = vmatpush1.msra.mxu0 0.0
  %1529 = vmatprep.subr.mxu0 0.0
  %1530 = vmatpush1.msra.mxu0 0.0
  %1531 = vmatprep.subr.mxu0 0.0
  %1532 = vmatpush1.msra.mxu0 0.0
  %1533 = vmatprep.subr.mxu0 0.0
  %1534 = vmatpush1.msra.mxu0 0.0
  %1535 = vmatprep.subr.mxu0 0.0
  %1536 = vmatpush1.msra.mxu0 0.0
  %1537 = vmatprep.subr.mxu0 0.0
  %1538 = vmatpush1.msra.mxu0 0.0
  %1539 = vmatprep.subr.mxu0 0.0
  %1540 = vmatpush1.msra.mxu0 0.0
  %1541 = vmatprep.subr.mxu0 0.0
  %1542 = vmatpush1.msra.mxu0 0.0
  %1543 = vmatprep.subr.mxu0 0.0
  %1544 = vmatpush1.msra.mxu0 0.0
  %1545 = vmatprep.subr.mxu0 0.0
  %1546 = vmatpush1.msra.mxu0 0.0
  %1547 = vmatprep.subr.mxu0 0.0
  %1548 = vmatpush1.msra.mxu0 0.0
  %1549 = vmatprep.subr.mxu0 0.0
  %1550 = vmatpush1.msra.mxu0 0.0
  %1551 = vmatprep.subr.mxu0 0.0
  %1552 = vmatpush1.msra.mxu0 0.0
  %1553 = vmatprep.subr.mxu0 0.0
  %1554 = vmatpush1.msra.mxu0 0.0
  %1555 = vmatprep.subr.mxu0 0.0
  %1556 = vmatpush1.msra.mxu0 0.0
  %1557 = vmatprep.subr.mxu0 0.0
  %1558 = vmatpush1.msra.mxu0 0.0
  %1559 = vmatprep.subr.mxu0 0.0
  %1560 = vmatpush1.msra.mxu0 0.0
  %1561 = vmatprep.subr.mxu0 0.0
  %1562 = vmatpush1.msra.mxu0 0.0
  %1563 = vmatprep.subr.mxu0 0.0
  %1564 = vmatpush1.msra.mxu0 0.0
  %1565 = vmatprep.subr.mxu0 0.0
  %1566 = vmatpush1.msra.mxu0 0.0
  %1567 = vmatprep.subr.mxu0 0.0
  %1568 = vmatpush1.msra.mxu0 0.0
  %1569 = vmatprep.subr.mxu0 0.0
  %1570 = vmatpush1.msra.mxu0 0.0
  %1571 = vmatprep.subr.mxu0 0.0
  %1572 = vmatpush1.msra.mxu0 0.0
  %1573 = vmatprep.subr.mxu0 0.0
  %1574 = vmatpush1.msra.mxu0 0.0
  %1575 = vmatprep.subr.mxu0 0.0
  %1576 = vmatpush1.msra.mxu0 0.0
  %1577 = vmatprep.subr.mxu0 0.0
  %1578 = vmatpush1.msra.mxu0 0.0
  %1579 = vmatprep.subr.mxu0 0.0
  %1580 = vmatpush1.msra.mxu0 0.0
  %1581 = vmatprep.subr.mxu0 0.0
  %1582 = vmatpush1.msra.mxu0 0.0
  %1583 = vmatprep.subr.mxu0 0.0
  %1584 = vmatpush1.msra.mxu0 0.0
  %1585 = vmatprep.subr.mxu0 0.0
  %1586 = vmatpush1.msra.mxu0 0.0
  %1587 = vmatprep.mubr.f32.mxu0 0.0
  %1588 = vmatmul.mubr.f32.gmra.mrb[0].mxu0 %v1441
  %v1589 = vpop.f32.mrb[0].mxu0
  %v1590 = vadd.f32 0.0, %v1589
  %v1591 = vpop.f32.mrb[0].mxu0
  %v1592 = vadd.f32 0.0, %v1591
  %1593 = vmatprep.mubr.f32.mxu0 0.0
  %1594 = vmatmul.mubr.f32.gmra.mrb[0].mxu0 %v1444
  %v1595 = vpop.f32.mrb[0].mxu0
  %v1596 = vadd.f32 0.0, %v1595
  %v1597 = vpop.f32.mrb[0].mxu0
  %v1598 = vadd.f32 0.0, %v1597
  %1599 = vdwg.mxu0
  %1600 = vmatprep.subr.mxu0 %v1405
  %1601 = vmatpush1.msra.mxu0 %v1404
  %1602 = vmatprep.subr.mxu0 0.0
  %1603 = vmatpush1.msra.mxu0 0.0
  %1604 = vmatprep.subr.mxu0 0.0
  %1605 = vmatpush1.msra.mxu0 0.0
  %1606 = vmatprep.subr.mxu0 0.0
  %1607 = vmatpush1.msra.mxu0 0.0
  %1608 = vmatprep.subr.mxu0 0.0
  %1609 = vmatpush1.msra.mxu0 0.0
  %1610 = vmatprep.subr.mxu0 0.0
  %1611 = vmatpush1.msra.mxu0 0.0
  %1612 = vmatprep.subr.mxu0 0.0
  %1613 = vmatpush1.msra.mxu0 0.0
  %1614 = vmatprep.subr.mxu0 0.0
  %1615 = vmatpush1.msra.mxu0 0.0
  %1616 = vmatprep.subr.mxu0 0.0
  %1617 = vmatpush1.msra.mxu0 0.0
  %1618 = vmatprep.subr.mxu0 0.0
  %1619 = vmatpush1.msra.mxu0 0.0
  %1620 = vmatprep.subr.mxu0 0.0
  %1621 = vmatpush1.msra.mxu0 0.0
  %1622 = vmatprep.subr.mxu0 0.0
  %1623 = vmatpush1.msra.mxu0 0.0
  %1624 = vmatprep.subr.mxu0 0.0
  %1625 = vmatpush1.msra.mxu0 0.0
  %1626 = vmatprep.subr.mxu0 0.0
  %1627 = vmatpush1.msra.mxu0 0.0
  %1628 = vmatprep.subr.mxu0 0.0
  %1629 = vmatpush1.msra.mxu0 0.0
  %1630 = vmatprep.subr.mxu0 0.0
  %1631 = vmatpush1.msra.mxu0 0.0
  %1632 = vmatprep.subr.mxu0 0.0
  %1633 = vmatpush1.msra.mxu0 0.0
  %1634 = vmatprep.subr.mxu0 0.0
  %1635 = vmatpush1.msra.mxu0 0.0
  %1636 = vmatprep.subr.mxu0 0.0
  %1637 = vmatpush1.msra.mxu0 0.0
  %1638 = vmatprep.subr.mxu0 0.0
  %1639 = vmatpush1.msra.mxu0 0.0
  %1640 = vmatprep.subr.mxu0 0.0
  %1641 = vmatpush1.msra.mxu0 0.0
  %1642 = vmatprep.subr.mxu0 0.0
  %1643 = vmatpush1.msra.mxu0 0.0
  %1644 = vmatprep.subr.mxu0 0.0
  %1645 = vmatpush1.msra.mxu0 0.0
  %1646 = vmatprep.subr.mxu0 0.0
  %1647 = vmatpush1.msra.mxu0 0.0
  %1648 = vmatprep.subr.mxu0 0.0
  %1649 = vmatpush1.msra.mxu0 0.0
  %1650 = vmatprep.subr.mxu0 0.0
  %1651 = vmatpush1.msra.mxu0 0.0
  %1652 = vmatprep.subr.mxu0 0.0
  %1653 = vmatpush1.msra.mxu0 0.0
  %1654 = vmatprep.subr.mxu0 0.0
  %1655 = vmatpush1.msra.mxu0 0.0
  %1656 = vmatprep.subr.mxu0 0.0
  %1657 = vmatpush1.msra.mxu0 0.0
  %1658 = vmatprep.subr.mxu0 0.0
  %1659 = vmatpush1.msra.mxu0 0.0
  %1660 = vmatprep.subr.mxu0 0.0
  %1661 = vmatpush1.msra.mxu0 0.0
  %1662 = vmatprep.subr.mxu0 0.0
  %1663 = vmatpush1.msra.mxu0 0.0
  %1664 = vmatprep.mubr.f32.mxu0 0.0
  %1665 = vmatmul.mubr.f32.gmra.mrb[0].mxu0 %v1441
  %v1666 = vpop.f32.mrb[0].mxu0
  %v1667 = vadd.f32 0.0, %v1666
  %v1668 = vpop.f32.mrb[0].mxu0
  %v1669 = vadd.f32 0.0, %v1668
  %1670 = vmatprep.mubr.f32.mxu0 0.0
  %1671 = vmatmul.mubr.f32.gmra.mrb[0].mxu0 %v1444
  %v1672 = vpop.f32.mrb[0].mxu0
  %v1673 = vadd.f32 0.0, %v1672
  %v1674 = vpop.f32.mrb[0].mxu0
  %v1675 = vadd.f32 0.0, %v1674
  %1676 = vdwg.mxu0
  %1677 = vmatprep.subr.mxu0 %v1407
  %1678 = vmatpush1.msra.mxu0 %v1406
  %1679 = vmatprep.subr.mxu0 0.0
  %1680 = vmatpush1.msra.mxu0 0.0
  %1681 = vmatprep.subr.mxu0 0.0
  %1682 = vmatpush1.msra.mxu0 0.0
  %1683 = vmatprep.subr.mxu0 0.0
  %1684 = vmatpush1.msra.mxu0 0.0
  %1685 = vmatprep.subr.mxu0 0.0
  %1686 = vmatpush1.msra.mxu0 0.0
  %1687 = vmatprep.subr.mxu0 0.0
  %1688 = vmatpush1.msra.mxu0 0.0
  %1689 = vmatprep.subr.mxu0 0.0
  %1690 = vmatpush1.msra.mxu0 0.0
  %1691 = vmatprep.subr.mxu0 0.0
  %1692 = vmatpush1.msra.mxu0 0.0
  %1693 = vmatprep.subr.mxu0 0.0
  %1694 = vmatpush1.msra.mxu0 0.0
  %1695 = vmatprep.subr.mxu0 0.0
  %1696 = vmatpush1.msra.mxu0 0.0
  %1697 = vmatprep.subr.mxu0 0.0
  %1698 = vmatpush1.msra.mxu0 0.0
  %1699 = vmatprep.subr.mxu0 0.0
  %1700 = vmatpush1.msra.mxu0 0.0
  %1701 = vmatprep.subr.mxu0 0.0
  %1702 = vmatpush1.msra.mxu0 0.0
  %1703 = vmatprep.subr.mxu0 0.0
  %1704 = vmatpush1.msra.mxu0 0.0
  %1705 = vmatprep.subr.mxu0 0.0
  %1706 = vmatpush1.msra.mxu0 0.0
  %1707 = vmatprep.subr.mxu0 0.0
  %1708 = vmatpush1.msra.mxu0 0.0
  %1709 = vmatprep.subr.mxu0 0.0
  %1710 = vmatpush1.msra.mxu0 0.0
  %1711 = vmatprep.subr.mxu0 0.0
  %1712 = vmatpush1.msra.mxu0 0.0
  %1713 = vmatprep.subr.mxu0 0.0
  %1714 = vmatpush1.msra.mxu0 0.0
  %1715 = vmatprep.subr.mxu0 0.0
  %1716 = vmatpush1.msra.mxu0 0.0
  %1717 = vmatprep.subr.mxu0 0.0
  %1718 = vmatpush1.msra.mxu0 0.0
  %1719 = vmatprep.subr.mxu0 0.0
  %1720 = vmatpush1.msra.mxu0 0.0
  %1721 = vmatprep.subr.mxu0 0.0
  %1722 = vmatpush1.msra.mxu0 0.0
  %1723 = vmatprep.subr.mxu0 0.0
  %1724 = vmatpush1.msra.mxu0 0.0
  %1725 = vmatprep.subr.mxu0 0.0
  %1726 = vmatpush1.msra.mxu0 0.0
  %1727 = vmatprep.subr.mxu0 0.0
  %1728 = vmatpush1.msra.mxu0 0.0
  %1729 = vmatprep.subr.mxu0 0.0
  %1730 = vmatpush1.msra.mxu0 0.0
  %1731 = vmatprep.subr.mxu0 0.0
  %1732 = vmatpush1.msra.mxu0 0.0
  %1733 = vmatprep.subr.mxu0 0.0
  %1734 = vmatpush1.msra.mxu0 0.0
  %1735 = vmatprep.subr.mxu0 0.0
  %1736 = vmatpush1.msra.mxu0 0.0
  %1737 = vmatprep.subr.mxu0 0.0
  %1738 = vmatpush1.msra.mxu0 0.0
  %1739 = vmatprep.subr.mxu0 0.0
  %1740 = vmatpush1.msra.mxu0 0.0
  %1741 = vmatprep.mubr.f32.mxu0 0.0
  %1742 = vmatmul.mubr.f32.gmra.mrb[0].mxu0 %v1441
  %v1743 = vpop.f32.mrb[0].mxu0
  %v1744 = vadd.f32 0.0, %v1743
  %v1745 = vpop.f32.mrb[0].mxu0
  %v1746 = vadd.f32 0.0, %v1745
  %1747 = vmatprep.mubr.f32.mxu0 0.0
  %1748 = vmatmul.mubr.f32.gmra.mrb[0].mxu0 %v1444
  %v1749 = vpop.f32.mrb[0].mxu0
  %v1750 = vadd.f32 0.0, %v1749
  %v1751 = vpop.f32.mrb[0].mxu0
  %v1752 = vadd.f32 0.0, %v1751
  %1753 = vdwg.mxu0
  %v1755 = vsel %vm1439, %v1435, 0
  %v1758 = vsel %vm1439, %v1436, 0
  %1760 = vmatprep.subr.mxu0 %v1433
  %1761 = vmatpush1.msra.mxu0 %v1434
  %1762 = vmatprep.subr.mxu0 0.0
  %1763 = vmatpush1.msra.mxu0 0.0
  %1764 = vmatprep.subr.mxu0 0.0
  %1765 = vmatpush1.msra.mxu0 0.0
  %1766 = vmatprep.subr.mxu0 0.0
  %1767 = vmatpush1.msra.mxu0 0.0
  %1768 = vmatprep.subr.mxu0 0.0
  %1769 = vmatpush1.msra.mxu0 0.0
  %1770 = vmatprep.subr.mxu0 0.0
  %1771 = vmatpush1.msra.mxu0 0.0
  %1772 = vmatprep.subr.mxu0 0.0
  %1773 = vmatpush1.msra.mxu0 0.0
  %1774 = vmatprep.subr.mxu0 0.0
  %1775 = vmatpush1.msra.mxu0 0.0
  %1776 = vmatprep.subr.mxu0 0.0
  %1777 = vmatpush1.msra.mxu0 0.0
  %1778 = vmatprep.subr.mxu0 0.0
  %1779 = vmatpush1.msra.mxu0 0.0
  %1780 = vmatprep.subr.mxu0 0.0
  %1781 = vmatpush1.msra.mxu0 0.0
  %1782 = vmatprep.subr.mxu0 0.0
  %1783 = vmatpush1.msra.mxu0 0.0
  %1784 = vmatprep.subr.mxu0 0.0
  %1785 = vmatpush1.msra.mxu0 0.0
  %1786 = vmatprep.subr.mxu0 0.0
  %1787 = vmatpush1.msra.mxu0 0.0
  %1788 = vmatprep.subr.mxu0 0.0
  %1789 = vmatpush1.msra.mxu0 0.0
  %1790 = vmatprep.subr.mxu0 0.0
  %1791 = vmatpush1.msra.mxu0 0.0
  %1792 = vmatprep.subr.mxu0 0.0
  %1793 = vmatpush1.msra.mxu0 0.0
  %1794 = vmatprep.subr.mxu0 0.0
  %1795 = vmatpush1.msra.mxu0 0.0
  %1796 = vmatprep.subr.mxu0 0.0
  %1797 = vmatpush1.msra.mxu0 0.0
  %1798 = vmatprep.subr.mxu0 0.0
  %1799 = vmatpush1.msra.mxu0 0.0
  %1800 = vmatprep.subr.mxu0 0.0
  %1801 = vmatpush1.msra.mxu0 0.0
  %1802 = vmatprep.subr.mxu0 0.0
  %1803 = vmatpush1.msra.mxu0 0.0
  %1804 = vmatprep.subr.mxu0 0.0
  %1805 = vmatpush1.msra.mxu0 0.0
  %1806 = vmatprep.subr.mxu0 0.0
  %1807 = vmatpush1.msra.mxu0 0.0
  %1808 = vmatprep.subr.mxu0 0.0
  %1809 = vmatpush1.msra.mxu0 0.0
  %1810 = vmatprep.subr.mxu0 0.0
  %1811 = vmatpush1.msra.mxu0 0.0
  %1812 = vmatprep.subr.mxu0 0.0
  %1813 = vmatpush1.msra.mxu0 0.0
  %1814 = vmatprep.subr.mxu0 0.0
  %1815 = vmatpush1.msra.mxu0 0.0
  %1816 = vmatprep.subr.mxu0 0.0
  %1817 = vmatpush1.msra.mxu0 0.0
  %1818 = vmatprep.subr.mxu0 0.0
  %1819 = vmatpush1.msra.mxu0 0.0
  %1820 = vmatprep.subr.mxu0 0.0
  %1821 = vmatpush1.msra.mxu0 0.0
  %1822 = vmatprep.subr.mxu0 0.0
  %1823 = vmatpush1.msra.mxu0 0.0
  %1824 = vmatprep.mubr.f32.mxu0 0.0
  %1825 = vmatmul.mubr.f32.gmra.mrb[0].mxu0 %v1755
  %v1826 = vpop.f32.mrb[0].mxu0
  %v1827 = vadd.f32 %v1513, %v1826
  %v1828 = vpop.f32.mrb[0].mxu0
  %v1829 = vadd.f32 %v1515, %v1828
  %1830 = vmatprep.mubr.f32.mxu0 0.0
  %1831 = vmatmul.mubr.f32.gmra.mrb[0].mxu0 %v1758
  %v1832 = vpop.f32.mrb[0].mxu0
  %v1833 = vadd.f32 %v1519, %v1832
  %v1834 = vpop.f32.mrb[0].mxu0
  %v1835 = vadd.f32 %v1521, %v1834
  %1836 = vdwg.mxu0
  %1837 = vmatprep.subr.mxu0 %v1431
  %1838 = vmatpush1.msra.mxu0 %v1432
  %1839 = vmatprep.subr.mxu0 0.0
  %1840 = vmatpush1.msra.mxu0 0.0
  %1841 = vmatprep.subr.mxu0 0.0
  %1842 = vmatpush1.msra.mxu0 0.0
  %1843 = vmatprep.subr.mxu0 0.0
  %1844 = vmatpush1.msra.mxu0 0.0
  %1845 = vmatprep.subr.mxu0 0.0
  %1846 = vmatpush1.msra.mxu0 0.0
  %1847 = vmatprep.subr.mxu0 0.0
  %1848 = vmatpush1.msra.mxu0 0.0
  %1849 = vmatprep.subr.mxu0 0.0
  %1850 = vmatpush1.msra.mxu0 0.0
  %1851 = vmatprep.subr.mxu0 0.0
  %1852 = vmatpush1.msra.mxu0 0.0
  %1853 = vmatprep.subr.mxu0 0.0
  %1854 = vmatpush1.msra.mxu0 0.0
  %1855 = vmatprep.subr.mxu0 0.0
  %1856 = vmatpush1.msra.mxu0 0.0
  %1857 = vmatprep.subr.mxu0 0.0
  %1858 = vmatpush1.msra.mxu0 0.0
  %1859 = vmatprep.subr.mxu0 0.0
  %1860 = vmatpush1.msra.mxu0 0.0
  %1861 = vmatprep.subr.mxu0 0.0
  %1862 = vmatpush1.msra.mxu0 0.0
  %1863 = vmatprep.subr.mxu0 0.0
  %1864 = vmatpush1.msra.mxu0 0.0
  %1865 = vmatprep.subr.mxu0 0.0
  %1866 = vmatpush1.msra.mxu0 0.0
  %1867 = vmatprep.subr.mxu0 0.0
  %1868 = vmatpush1.msra.mxu0 0.0
  %1869 = vmatprep.subr.mxu0 0.0
  %1870 = vmatpush1.msra.mxu0 0.0
  %1871 = vmatprep.subr.mxu0 0.0
  %1872 = vmatpush1.msra.mxu0 0.0
  %1873 = vmatprep.subr.mxu0 0.0
  %1874 = vmatpush1.msra.mxu0 0.0
  %1875 = vmatprep.subr.mxu0 0.0
  %1876 = vmatpush1.msra.mxu0 0.0
  %1877 = vmatprep.subr.mxu0 0.0
  %1878 = vmatpush1.msra.mxu0 0.0
  %1879 = vmatprep.subr.mxu0 0.0
  %1880 = vmatpush1.msra.mxu0 0.0
  %1881 = vmatprep.subr.mxu0 0.0
  %1882 = vmatpush1.msra.mxu0 0.0
  %1883 = vmatprep.subr.mxu0 0.0
  %1884 = vmatpush1.msra.mxu0 0.0
  %1885 = vmatprep.subr.mxu0 0.0
  %1886 = vmatpush1.msra.mxu0 0.0
  %1887 = vmatprep.subr.mxu0 0.0
  %1888 = vmatpush1.msra.mxu0 0.0
  %1889 = vmatprep.subr.mxu0 0.0
  %1890 = vmatpush1.msra.mxu0 0.0
  %1891 = vmatprep.subr.mxu0 0.0
  %1892 = vmatpush1.msra.mxu0 0.0
  %1893 = vmatprep.subr.mxu0 0.0
  %1894 = vmatpush1.msra.mxu0 0.0
  %1895 = vmatprep.subr.mxu0 0.0
  %1896 = vmatpush1.msra.mxu0 0.0
  %1897 = vmatprep.subr.mxu0 0.0
  %1898 = vmatpush1.msra.mxu0 0.0
  %1899 = vmatprep.subr.mxu0 0.0
  %1900 = vmatpush1.msra.mxu0 0.0
  %1901 = vmatprep.mubr.f32.mxu0 0.0
  %1902 = vmatmul.mubr.f32.gmra.mrb[0].mxu0 %v1755
  %v1903 = vpop.f32.mrb[0].mxu0
  %v1904 = vadd.f32 %v1590, %v1903
  %v1905 = vpop.f32.mrb[0].mxu0
  %v1906 = vadd.f32 %v1592, %v1905
  %1907 = vmatprep.mubr.f32.mxu0 0.0
  %1908 = vmatmul.mubr.f32.gmra.mrb[0].mxu0 %v1758
  %v1909 = vpop.f32.mrb[0].mxu0
  %v1910 = vadd.f32 %v1596, %v1909
  %v1911 = vpop.f32.mrb[0].mxu0
  %v1912 = vadd.f32 %v1598, %v1911
  %1913 = vdwg.mxu0
  %1914 = vmatprep.subr.mxu0 %v1429
  %1915 = vmatpush1.msra.mxu0 %v1430
  %1916 = vmatprep.subr.mxu0 0.0
  %1917 = vmatpush1.msra.mxu0 0.0
  %1918 = vmatprep.subr.mxu0 0.0
  %1919 = vmatpush1.msra.mxu0 0.0
  %1920 = vmatprep.subr.mxu0 0.0
  %1921 = vmatpush1.msra.mxu0 0.0
  %1922 = vmatprep.subr.mxu0 0.0
  %1923 = vmatpush1.msra.mxu0 0.0
  %1924 = vmatprep.subr.mxu0 0.0
  %1925 = vmatpush1.msra.mxu0 0.0
  %1926 = vmatprep.subr.mxu0 0.0
  %1927 = vmatpush1.msra.mxu0 0.0
  %1928 = vmatprep.subr.mxu0 0.0
  %1929 = vmatpush1.msra.mxu0 0.0
  %1930 = vmatprep.subr.mxu0 0.0
  %1931 = vmatpush1.msra.mxu0 0.0
  %1932 = vmatprep.subr.mxu0 0.0
  %1933 = vmatpush1.msra.mxu0 0.0
  %1934 = vmatprep.subr.mxu0 0.0
  %1935 = vmatpush1.msra.mxu0 0.0
  %1936 = vmatprep.subr.mxu0 0.0
  %1937 = vmatpush1.msra.mxu0 0.0
  %1938 = vmatprep.subr.mxu0 0.0
  %1939 = vmatpush1.msra.mxu0 0.0
  %1940 = vmatprep.subr.mxu0 0.0
  %1941 = vmatpush1.msra.mxu0 0.0
  %1942 = vmatprep.subr.mxu0 0.0
  %1943 = vmatpush1.msra.mxu0 0.0
  %1944 = vmatprep.subr.mxu0 0.0
  %1945 = vmatpush1.msra.mxu0 0.0
  %1946 = vmatprep.subr.mxu0 0.0
  %1947 = vmatpush1.msra.mxu0 0.0
  %1948 = vmatprep.subr.mxu0 0.0
  %1949 = vmatpush1.msra.mxu0 0.0
  %1950 = vmatprep.subr.mxu0 0.0
  %1951 = vmatpush1.msra.mxu0 0.0
  %1952 = vmatprep.subr.mxu0 0.0
  %1953 = vmatpush1.msra.mxu0 0.0
  %1954 = vmatprep.subr.mxu0 0.0
  %1955 = vmatpush1.msra.mxu0 0.0
  %1956 = vmatprep.subr.mxu0 0.0
  %1957 = vmatpush1.msra.mxu0 0.0
  %1958 = vmatprep.subr.mxu0 0.0
  %1959 = vmatpush1.msra.mxu0 0.0
  %1960 = vmatprep.subr.mxu0 0.0
  %1961 = vmatpush1.msra.mxu0 0.0
  %1962 = vmatprep.subr.mxu0 0.0
  %1963 = vmatpush1.msra.mxu0 0.0
  %1964 = vmatprep.subr.mxu0 0.0
  %1965 = vmatpush1.msra.mxu0 0.0
  %1966 = vmatprep.subr.mxu0 0.0
  %1967 = vmatpush1.msra.mxu0 0.0
  %1968 = vmatprep.subr.mxu0 0.0
  %1969 = vmatpush1.msra.mxu0 0.0
  %1970 = vmatprep.subr.mxu0 0.0
  %1971 = vmatpush1.msra.mxu0 0.0
  %1972 = vmatprep.subr.mxu0 0.0
  %1973 = vmatpush1.msra.mxu0 0.0
  %1974 = vmatprep.subr.mxu0 0.0
  %1975 = vmatpush1.msra.mxu0 0.0
  %1976 = vmatprep.subr.mxu0 0.0
  %1977 = vmatpush1.msra.mxu0 0.0
  %1978 = vmatprep.mubr.f32.mxu0 0.0
  %1979 = vmatmul.mubr.f32.gmra.mrb[0].mxu0 %v1755
  %v1980 = vpop.f32.mrb[0].mxu0
  %v1981 = vadd.f32 %v1667, %v1980
  %v1982 = vpop.f32.mrb[0].mxu0
  %v1983 = vadd.f32 %v1669, %v1982
  %1984 = vmatprep.mubr.f32.mxu0 0.0
  %1985 = vmatmul.mubr.f32.gmra.mrb[0].mxu0 %v1758
  %v1986 = vpop.f32.mrb[0].mxu0
  %v1987 = vadd.f32 %v1673, %v1986
  %v1988 = vpop.f32.mrb[0].mxu0
  %v1989 = vadd.f32 %v1675, %v1988
  %1990 = vdwg.mxu0
  %1991 = vmatprep.subr.mxu0 %v1427
  %1992 = vmatpush1.msra.mxu0 %v1428
  %1993 = vmatprep.subr.mxu0 0.0
  %1994 = vmatpush1.msra.mxu0 0.0
  %1995 = vmatprep.subr.mxu0 0.0
  %1996 = vmatpush1.msra.mxu0 0.0
  %1997 = vmatprep.subr.mxu0 0.0
  %1998 = vmatpush1.msra.mxu0 0.0
  %1999 = vmatprep.subr.mxu0 0.0
  %2000 = vmatpush1.msra.mxu0 0.0
  %2001 = vmatprep.subr.mxu0 0.0
  %2002 = vmatpush1.msra.mxu0 0.0
  %2003 = vmatprep.subr.mxu0 0.0
  %2004 = vmatpush1.msra.mxu0 0.0
  %2005 = vmatprep.subr.mxu0 0.0
  %2006 = vmatpush1.msra.mxu0 0.0
  %2007 = vmatprep.subr.mxu0 0.0
  %2008 = vmatpush1.msra.mxu0 0.0
  %2009 = vmatprep.subr.mxu0 0.0
  %2010 = vmatpush1.msra.mxu0 0.0
  %2011 = vmatprep.subr.mxu0 0.0
  %2012 = vmatpush1.msra.mxu0 0.0
  %2013 = vmatprep.subr.mxu0 0.0
  %2014 = vmatpush1.msra.mxu0 0.0
  %2015 = vmatprep.subr.mxu0 0.0
  %2016 = vmatpush1.msra.mxu0 0.0
  %2017 = vmatprep.subr.mxu0 0.0
  %2018 = vmatpush1.msra.mxu0 0.0
  %2019 = vmatprep.subr.mxu0 0.0
  %2020 = vmatpush1.msra.mxu0 0.0
  %2021 = vmatprep.subr.mxu0 0.0
  %2022 = vmatpush1.msra.mxu0 0.0
  %2023 = vmatprep.subr.mxu0 0.0
  %2024 = vmatpush1.msra.mxu0 0.0
  %2025 = vmatprep.subr.mxu0 0.0
  %2026 = vmatpush1.msra.mxu0 0.0
  %2027 = vmatprep.subr.mxu0 0.0
  %2028 = vmatpush1.msra.mxu0 0.0
  %2029 = vmatprep.subr.mxu0 0.0
  %2030 = vmatpush1.msra.mxu0 0.0
  %2031 = vmatprep.subr.mxu0 0.0
  %2032 = vmatpush1.msra.mxu0 0.0
  %2033 = vmatprep.subr.mxu0 0.0
  %2034 = vmatpush1.msra.mxu0 0.0
  %2035 = vmatprep.subr.mxu0 0.0
  %2036 = vmatpush1.msra.mxu0 0.0
  %2037 = vmatprep.subr.mxu0 0.0
  %2038 = vmatpush1.msra.mxu0 0.0
  %2039 = vmatprep.subr.mxu0 0.0
  %2040 = vmatpush1.msra.mxu0 0.0
  %2041 = vmatprep.subr.mxu0 0.0
  %2042 = vmatpush1.msra.mxu0 0.0
  %2043 = vmatprep.subr.mxu0 0.0
  %2044 = vmatpush1.msra.mxu0 0.0
  %2045 = vmatprep.subr.mxu0 0.0
  %2046 = vmatpush1.msra.mxu0 0.0
  %2047 = vmatprep.subr.mxu0 0.0
  %2048 = vmatpush1.msra.mxu0 0.0
  %2049 = vmatprep.subr.mxu0 0.0
  %2050 = vmatpush1.msra.mxu0 0.0
  %2051 = vmatprep.subr.mxu0 0.0
  %2052 = vmatpush1.msra.mxu0 0.0
  %2053 = vmatprep.subr.mxu0 0.0
  %2054 = vmatpush1.msra.mxu0 0.0
  %2055 = vmatprep.mubr.f32.mxu0 0.0
  %2056 = vmatmul.mubr.f32.gmra.mrb[0].mxu0 %v1755
  %v2057 = vpop.f32.mrb[0].mxu0
  %v2058 = vadd.f32 %v1744, %v2057
  %v2059 = vpop.f32.mrb[0].mxu0
  %v2060 = vadd.f32 %v1746, %v2059
  %2061 = vmatprep.mubr.f32.mxu0 0.0
  %2062 = vmatmul.mubr.f32.gmra.mrb[0].mxu0 %v1758
  %v2063 = vpop.f32.mrb[0].mxu0
  %v2064 = vadd.f32 %v1750, %v2063
  %v2065 = vpop.f32.mrb[0].mxu0
  %v2066 = vadd.f32 %v1752, %v2065
  %2067 = vdwg.mxu0
  %v2068 = vld [vmem:[%s6] sm:$0xff]
  %v2069 = vld [vmem:[%s6 + $0x8] sm:$0xff]
  %2071 = vset.pattern.permute.xlu0 0
  %2072 = vperm.xlu0 %2071, %v2068
  %v2073 = vpop.permute.xlu0 %2072
  %2076 = vset.pattern.permute.xlu0 0
  %2077 = vperm.xlu0 %2076, %v2069
  %v2078 = vpop.permute.xlu0 %2077
  %v2080 = vadd.f32 %v1827, %v2073
  %v2081 = vadd.f32 %v1829, %v2073
  %v2082 = vadd.f32 %v1904, %v2073
  %v2083 = vadd.f32 %v1906, %v2073
  %v2084 = vadd.f32 %v1981, %v2073
  %v2085 = vadd.f32 %v1983, %v2073
  %v2086 = vadd.f32 %v2058, %v2073
  %v2087 = vadd.f32 %v2060, %v2073
  %v2088 = vadd.f32 %v1833, %v2078
  %v2089 = vadd.f32 %v1835, %v2078
  %v2090 = vadd.f32 %v1910, %v2078
  %v2091 = vadd.f32 %v1912, %v2078
  %v2092 = vadd.f32 %v1987, %v2078
  %v2093 = vadd.f32 %v1989, %v2078
  %v2094 = vadd.f32 %v2064, %v2078
  %v2095 = vadd.f32 %v2066, %v2078
  %v2096 = vmax.f32 %v2080, 0.0
  %v2097 = vmax.f32 %v2081, 0.0
  %v2098 = vmax.f32 %v2082, 0.0
  %v2099 = vmax.f32 %v2083, 0.0
  %v2100 = vmax.f32 %v2084, 0.0
  %v2101 = vmax.f32 %v2085, 0.0
  %v2102 = vmax.f32 %v2086, 0.0
  %v2103 = vmax.f32 %v2087, 0.0
  %v2104 = vmax.f32 %v2088, 0.0
  %v2105 = vmax.f32 %v2089, 0.0
  %v2106 = vmax.f32 %v2090, 0.0
  %v2107 = vmax.f32 %v2091, 0.0
  %v2108 = vmax.f32 %v2092, 0.0
  %v2109 = vmax.f32 %v2093, 0.0
  %v2110 = vmax.f32 %v2094, 0.0
  %v2111 = vmax.f32 %v2095, 0.0
  %2112 = vst [vmem:[%s7] sm:$0xff] %v2096
  %2113 = vst [vmem:[%s7 + $0x8] sm:$0xff] %v2097
  %2114 = vst [vmem:[%s7 + $0x10] sm:$0xff] %v2098
  %2115 = vst [vmem:[%s7 + $0x18] sm:$0xff] %v2099
  %2116 = vst [vmem:[%s7 + $0x20] sm:$0xff] %v2100
  %2117 = vst [vmem:[%s7 + $0x28] sm:$0xff] %v2101
  %2118 = vst [vmem:[%s7 + $0x30] sm:$0xff] %v2102
  %2119 = vst [vmem:[%s7 + $0x38] sm:$0xff] %v2103
  %2120 = vst [vmem:[%s7 + $0x40] sm:$0xff] %v2104
  %2121 = vst [vmem:[%s7 + $0x48] sm:$0xff] %v2105
  %2122 = vst [vmem:[%s7 + $0x50] sm:$0xff] %v2106
  %2123 = vst [vmem:[%s7 + $0x58] sm:$0xff] %v2107
  %2124 = vst [vmem:[%s7 + $0x60] sm:$0xff] %v2108
  %2125 = vst [vmem:[%s7 + $0x68] sm:$0xff] %v2109
  %2126 = vst [vmem:[%s7 + $0x70] sm:$0xff] %v2110
  %2127 = vst [vmem:[%s7 + $0x78] sm:$0xff] %v2111
  // Predicated region
  $region30: #{cnn1d_forward.2} parent=0 // pred_check
    _
  $region31: #{cnn1d_forward.2} parent=0 // pred_check_branch
    %2129 = sbr.rel (0) target = $region33
  $region32: #{cnn1d_forward.2} parent=0 // pred_region
    _
  $region33: #{cnn1d_forward.2} parent=0 // pred_fallthru
    _
  // Predicated region
  $region34: #{cnn1d_forward.2} parent=0 // pred_check
    _
  $region35: #{cnn1d_forward.2} parent=0 // pred_check_branch
    %2131 = sbr.rel (0) target = $region37
  $region36: #{cnn1d_forward.2} parent=0 // pred_region
    _
  $region37: #{cnn1d_forward.2} parent=0 // pred_fallthru
    _

</llo_original>
